<compile_context>
chip_gen: v6e
topology: v6e:2x2x1
jax: 0.10.0
libtpu: 0.0.40
codegen_flags: <defaults>
</compile_context>

<pallas_src>
import jax
import jax.numpy as jnp
from jax.experimental import pallas as pl
from jax.experimental.pallas import tpu as pltpu

# Small, tile-friendly shapes consistent with the module
# (original: embed_dim=256, hidden_size=512, vocab_size=len(vocab)).
B, S, E, H, V = 2, 8, 64, 128, 256
SUBLANE = 8
TILE_V = 128                      # vocab tile for the fc projection grid
VMEM_LIMIT = 32 * 1024 * 1024     # explicit scoped-VMEM limit (v5e/v6e defaults are low)


# --------------------------------------------------------------------------
# Kernel 1: attention + single LSTM step  -> (h1, c1)
# --------------------------------------------------------------------------
def _attn_lstm_kernel(emb_ref, h0_ref, c0_ref, encw_ref, enc_ref,
                      wa_ref, ba_ref, va_ref, bv_ref,
                      w_gates_ref, b_gates_ref,
                      h1_ref, c1_ref):
    f32, bf16 = jnp.float32, jnp.bfloat16
    emb = emb_ref[...]                        # (Bp, E)    f32
    h0 = h0_ref[...]                          # (Bp, H)    f32
    c0 = c0_ref[...]                          # (Bp, H)    f32
    enc = enc_ref[...].astype(f32)            # (Bp, S, H) shipped bf16, f32 VPU math
    b, s, h = enc.shape

    # ---- Attention: energy = tanh(enc@W + h0@W + b).
    # enc@W is step-invariant and precomputed per sequence (encw_ref); only the
    # tiny (Bp,H)@(H,H) matmul runs per step.  bf16 MXU operands, f32 accumulate.
    h0w = jnp.dot(h0.astype(bf16), wa_ref[...], preferred_element_type=f32)   # (Bp, H)
    energy = jnp.tanh(encw_ref[...].astype(f32) + h0w[:, None, :] + ba_ref[...])
    # V-projection (output width 1) as a VPU multiply + lane reduce (no N=1 MXU
    # matmul).  The V bias is a softmax-invariant shift; kept for faithfulness.
    scores = jnp.sum(energy * va_ref[...][None, :, :], axis=-1) + bv_ref[...]  # (Bp, S)
    scores = scores - jnp.max(scores, axis=-1, keepdims=True)
    p = jnp.exp(scores)
    attn = p / jnp.sum(p, axis=-1, keepdims=True)                              # (Bp, S)
    context = jnp.sum(attn[:, :, None] * enc, axis=1)                          # (Bp, H)

    # ---- LSTM single step: ONE fused (Bp, 2H+E) @ (2H+E, 4H) matmul.
    # PyTorch gate order i,f,g,o; bias = b_ih + b_hh pre-summed in the wrapper.
    # Segments are ordered [context, h0, emb] so lane offsets stay 128-aligned;
    # the stacked weight rows match this order.
    lstm_in = jnp.concatenate([context, h0, emb], axis=-1).astype(bf16)        # (Bp, 2H+E)
    gates = (jnp.dot(lstm_in, w_gates_ref[...], preferred_element_type=f32)
             + b_gates_ref[...])                                               # (Bp, 4H)
    i_g = jax.nn.sigmoid(gates[:, 0 * h:1 * h])
    f_g = jax.nn.sigmoid(gates[:, 1 * h:2 * h])
    g_g = jnp.tanh(gates[:, 2 * h:3 * h])
    o_g = jax.nn.sigmoid(gates[:, 3 * h:4 * h])
    c1 = f_g * c0 + i_g * g_g
    h1 = o_g * jnp.tanh(c1)
    h1_ref[...] = h1
    c1_ref[...] = c1


# --------------------------------------------------------------------------
# Kernel 2: vocab projection, tiled over the vocab axis.
# --------------------------------------------------------------------------
def _fc_kernel(h1_ref, wfc_ref, bfc_ref, logits_ref):
    # One (Bp, H) @ (H, TILE_V) tile per grid step.  The grid gives automatic
    # double-buffering of the weight tiles (DMA overlaps the matmul) and the
    # "parallel" vocab axis lets megacore parts split the work.
    logits_ref[...] = (jnp.dot(h1_ref[...].astype(jnp.bfloat16), wfc_ref[...],
                               preferred_element_type=jnp.float32)
                       + bfc_ref[...])


# --------------------------------------------------------------------------
# Parameters & one-time layout preparation.
# --------------------------------------------------------------------------
def init_params(key):
    ks = jax.random.split(key, 10)
    scale = 0.05
    f32, bf16 = jnp.float32, jnp.bfloat16
    n = lambda k, shape: scale * jax.random.normal(k, shape, f32)
    return {
        # Big weight matrices are stored in bfloat16 (native MXU operand dtype,
        # halves weight DMA); biases / small vectors / embedding stay float32.
        "embedding": n(ks[0], (V, E)),
        "att_W":     n(ks[1], (H, H)).astype(bf16),
        "att_Wb":    n(ks[2], (H,)),
        "att_V":     n(ks[3], (1, H)),
        "att_Vb":    n(ks[4], (1,)),
        "W_ih":      n(ks[5], (4 * H, E + H)).astype(bf16),
        "b_ih":      n(ks[6], (4 * H,)),
        "W_hh":      n(ks[7], (4 * H, H)).astype(bf16),
        "b_hh":      n(ks[8], (4 * H,)),
        "fc_W":      n(ks[9], (V, H)).astype(bf16),
        "fc_b":      jnp.zeros((V,), f32),
        # TODO(synk): on v7x, optionally store fc_W in fp8 with per-tile scales
        # to halve the vocab-projection DMA again (gate behind a quality check).
    }


def prepare_weights(params):
    """One-time weight layout prep (transpose / stack / pre-sum biases).
    In an autoregressive decode loop, call this once outside the loop."""
    f32 = jnp.float32
    w_ih_t = params["W_ih"].T                                  # (E+H, 4H) bf16
    # Stack [W_ih_context ; W_hh ; W_ih_emb] to match lstm_in = [context, h0, emb].
    w_gates = jnp.concatenate([w_ih_t[E:], params["W_hh"].T, w_ih_t[:E]], axis=0)
    return {
        "wa":      params["att_W"].T,                                        # (H, H)  bf16
        "ba":      params["att_Wb"][None, :].astype(f32),                    # (1, H)
        "va":      params["att_V"].astype(f32),                              # (1, H)
        "bv":      params["att_Vb"].reshape(1, 1).astype(f32),               # (1, 1)
        "w_gates": w_gates,                                                  # (2H+E, 4H) bf16
        "b_gates": (params["b_ih"] + params["b_hh"])[None, :].astype(f32),   # (1, 4H)
        "wfc":     params["fc_W"].T,                                         # (H, V)  bf16
        "bfc":     params["fc_b"][None, :].astype(f32),                      # (1, V)
    }


def prepare_encoder(encoder_outputs, weights, batch):
    """Once per sequence: pad the batch to a sublane multiple, ship the encoder
    outputs in bf16 (halves the recurring per-step DMA), and precompute the
    step-invariant enc @ att_W term so it is not recomputed every decode step."""
    pad = (-batch) % SUBLANE
    enc_p = jnp.pad(encoder_outputs, ((0, pad), (0, 0), (0, 0))).astype(jnp.bfloat16)
    encw_p = jnp.einsum("bsh,hk->bsk", enc_p, weights["wa"],
                        preferred_element_type=jnp.float32).astype(jnp.bfloat16)
    return enc_p, encw_p


def prepare_state(hidden, batch):
    """Once per decode loop: PyTorch (1, B, H) LSTM state -> padded (Bp, H)."""
    h0, c0 = hidden
    pad = (-batch) % SUBLANE
    return (jnp.pad(h0[0], ((0, pad), (0, 0))),
            jnp.pad(c0[0], ((0, pad), (0, 0))))


def finalize_state(state_p, batch):
    """Padded (Bp, H) state -> PyTorch (1, B, H) convention."""
    h1_p, c1_p = state_p
    return h1_p[:batch][None], c1_p[:batch][None]


# --------------------------------------------------------------------------
# Decode step on pre-padded buffers (what an autoregressive loop should call).
# --------------------------------------------------------------------------
def decoder_step(x, state_p, enc_prepared, params, weights):
    """One decode step.  state_p / enc_prepared are the pre-padded buffers from
    prepare_state / prepare_encoder; returns (padded logits, padded new state)
    so the h/c aliasing gives an in-place state update across loop steps."""
    h0_p, c0_p = state_p
    enc_p, encw_p = enc_prepared
    bp = h0_p.shape[0]

    # Glue: embedding lookup stays in plain JAX (data-dependent row gather).
    emb = jnp.take(params["embedding"], x[:, 0], axis=0)               # (B, E)
    emb_p = jnp.pad(emb, ((0, bp - emb.shape[0]), (0, 0)))             # (Bp, E)

    vmem = pl.BlockSpec(memory_space=pltpu.MemorySpace.VMEM)
    attn_inputs = (emb_p, h0_p, c0_p, encw_p, enc_p,
                   weights["wa"], weights["ba"], weights["va"], weights["bv"],
                   weights["w_gates"], weights["b_gates"])
    h1_p, c1_p = pl.pallas_call(
        _attn_lstm_kernel,
        out_shape=(jax.ShapeDtypeStruct((bp, H), jnp.float32),
                   jax.ShapeDtypeStruct((bp, H), jnp.float32)),
        in_specs=[vmem] * len(attn_inputs),
        out_specs=(vmem, vmem),
        # h/c state updated in place across decode steps.
        input_output_aliases={1: 0, 2: 1},
        compiler_params=pltpu.CompilerParams(vmem_limit_bytes=VMEM_LIMIT),
    )(*attn_inputs)

    # Vocab projection, tiled over the vocab axis: fc_W tile DMA overlaps the
    # matmul (auto double-buffering) and resident VMEM is capped at ~2 tiles.
    tile_v = min(TILE_V, V)
    assert V % tile_v == 0
    logits_p = pl.pallas_call(
        _fc_kernel,
        out_shape=jax.ShapeDtypeStruct((bp, V), jnp.float32),
        grid=(V // tile_v,),
        in_specs=[pl.BlockSpec((bp, H), lambda j: (0, 0)),
                  pl.BlockSpec((H, tile_v), lambda j: (0, j)),
                  pl.BlockSpec((1, tile_v), lambda j: (0, j))],
        out_specs=pl.BlockSpec((bp, tile_v), lambda j: (0, j)),
        compiler_params=pltpu.CompilerParams(
            dimension_semantics=("parallel",),
            vmem_limit_bytes=VMEM_LIMIT),
    )(h1_p, weights["wfc"], weights["bfc"])

    return logits_p, (h1_p, c1_p)


def decoder_forward(x, hidden, encoder_outputs, params, weights=None):
    """Pallas implementation of Decoder.forward: returns (logits, (h1, c1)).
    For an autoregressive loop, call prepare_weights / prepare_encoder /
    prepare_state once and iterate decoder_step on the padded buffers."""
    if weights is None:
        weights = prepare_weights(params)
    b_in = x.shape[0]
    state_p = prepare_state(hidden, b_in)
    enc_prepared = prepare_encoder(encoder_outputs, weights, b_in)
    logits_p, state_p = decoder_step(x, state_p, enc_prepared, params, weights)
    h1, c1 = finalize_state(state_p, b_in)
    return logits_p[:b_in], (h1, c1)


# --------------------------------------------------------------------------
# Pure-JAX reference (mirrors the PyTorch module: same bf16-stored weights,
# f32 math, f32 encoder outputs).
# --------------------------------------------------------------------------
def reference_forward(x, hidden, enc, params):
    f32 = lambda a: a.astype(jnp.float32)
    h0, c0 = hidden
    emb = params["embedding"][x[:, 0]]                                   # (B, E)
    hid = jnp.transpose(h0, (1, 0, 2))                                   # (B, 1, H)
    energy = jnp.tanh((enc + hid) @ f32(params["att_W"]).T + params["att_Wb"])
    scores = energy @ f32(params["att_V"]).T + params["att_Vb"]          # (B, S, 1)
    attn = jax.nn.softmax(scores, axis=1)
    context = jnp.sum(attn * enc, axis=1)                                # (B, H)
    xcat = jnp.concatenate([emb, context], axis=1)
    gates = (xcat @ f32(params["W_ih"]).T + params["b_ih"]
             + h0[0] @ f32(params["W_hh"]).T + params["b_hh"])
    i = jax.nn.sigmoid(gates[:, :H]);      f = jax.nn.sigmoid(gates[:, H:2 * H])
    g = jnp.tanh(gates[:, 2 * H:3 * H]);   o = jax.nn.sigmoid(gates[:, 3 * H:])
    c1 = f * c0[0] + i * g
    h1 = o * jnp.tanh(c1)
    logits = h1 @ f32(params["fc_W"]).T + params["fc_b"]
    return logits, (h1[None], c1[None])


if __name__ == "__main__":
    key = jax.random.PRNGKey(0)
    k_p, k_x, k_h, k_c, k_e = jax.random.split(key, 5)

    params = init_params(k_p)
    weights = prepare_weights(params)   # one-time layout prep (outside any decode loop)
    x = jax.random.randint(k_x, (B, 1), 0, V, dtype=jnp.int32)
    h0 = 0.1 * jax.random.normal(k_h, (1, B, H), jnp.float32)
    c0 = 0.1 * jax.random.normal(k_c, (1, B, H), jnp.float32)
    enc = 0.1 * jax.random.normal(k_e, (B, S, H), jnp.float32)

    logits, (h1, c1) = decoder_forward(x, (h0, c0), enc, params, weights)
    jax.block_until_ready((logits, h1, c1))

    ref_logits, (ref_h1, ref_c1) = reference_forward(x, (h0, c0), enc, params)
    # bf16 MXU operands / bf16-shipped encoder vs. the f32-math reference:
    # slightly looser tolerance than pure-f32 but still tight.
    assert jnp.allclose(logits, ref_logits, atol=2e-3, rtol=2e-3)
    assert jnp.allclose(h1, ref_h1, atol=2e-3, rtol=2e-3)
    assert jnp.allclose(c1, ref_c1, atol=2e-3, rtol=2e-3)

    print("KERNEL_OK")
</pallas_src>

<mosaic_0001>
module attributes {stable_mosaic.version = 11 : i64} {
  func.func @_attn_lstm_kernel(%arg0: memref<8x64xf32, #tpu.memory_space<vmem>>, %arg1: memref<8x128xf32, #tpu.memory_space<vmem>>, %arg2: memref<8x128xf32, #tpu.memory_space<vmem>>, %arg3: memref<8x8x128xbf16, #tpu.memory_space<vmem>>, %arg4: memref<8x8x128xbf16, #tpu.memory_space<vmem>>, %arg5: memref<128x128xbf16, #tpu.memory_space<vmem>>, %arg6: memref<1x128xf32, #tpu.memory_space<vmem>>, %arg7: memref<1x128xf32, #tpu.memory_space<vmem>>, %arg8: memref<1x1xf32, #tpu.memory_space<vmem>>, %arg9: memref<320x512xbf16, #tpu.memory_space<vmem>>, %arg10: memref<1x512xf32, #tpu.memory_space<vmem>>, %arg11: memref<8x128xf32, #tpu.memory_space<vmem>>, %arg12: memref<8x128xf32, #tpu.memory_space<vmem>>) attributes {dimension_semantics = [], scalar_prefetch = 0 : i64, scratch_operands = 0 : i64, tpu.core_type = #tpu.core_type<tc>} {
    %c0 = arith.constant 0 : index
    %c0_0 = arith.constant 0 : index
    %0 = vector.load %arg0[%c0, %c0_0] : memref<8x64xf32, #tpu.memory_space<vmem>>, vector<8x64xf32>
    %c0_1 = arith.constant 0 : index
    %c0_2 = arith.constant 0 : index
    %1 = vector.load %arg1[%c0_1, %c0_2] : memref<8x128xf32, #tpu.memory_space<vmem>>, vector<8x128xf32>
    %c0_3 = arith.constant 0 : index
    %c0_4 = arith.constant 0 : index
    %2 = vector.load %arg2[%c0_3, %c0_4] : memref<8x128xf32, #tpu.memory_space<vmem>>, vector<8x128xf32>
    %c0_5 = arith.constant 0 : index
    %c0_6 = arith.constant 0 : index
    %c0_7 = arith.constant 0 : index
    %3 = vector.load %arg4[%c0_5, %c0_6, %c0_7] : memref<8x8x128xbf16, #tpu.memory_space<vmem>>, vector<8x8x128xbf16>
    %4 = arith.extf %3 : vector<8x8x128xbf16> to vector<8x8x128xf32>
    %5 = arith.truncf %1 : vector<8x128xf32> to vector<8x128xbf16>
    %c0_8 = arith.constant 0 : index
    %c0_9 = arith.constant 0 : index
    %6 = vector.load %arg5[%c0_8, %c0_9] : memref<128x128xbf16, #tpu.memory_space<vmem>>, vector<128x128xbf16>
    %cst = arith.constant dense<0.000000e+00> : vector<8x128xf32>
    %7 = tpu.matmul %5, %6, %cst {dimension_numbers = #tpu.dot_dimension_numbers<[1], [0], [0], [1], [0, 0, 1, 1], [], []>} : vector<8x128xbf16>, vector<128x128xbf16>, vector<8x128xf32> -> vector<8x128xf32>
    %c0_10 = arith.constant 0 : index
    %c0_11 = arith.constant 0 : index
    %c0_12 = arith.constant 0 : index
    %8 = vector.load %arg3[%c0_10, %c0_11, %c0_12] : memref<8x8x128xbf16, #tpu.memory_space<vmem>>, vector<8x8x128xbf16>
    %9 = arith.extf %8 : vector<8x8x128xbf16> to vector<8x8x128xf32>
    %10 = vector.shape_cast %7 : vector<8x128xf32> to vector<8x1x128xf32>
    %11 = vector.broadcast %10 : vector<8x1x128xf32> to vector<8x8x128xf32>
    %12 = arith.addf %9, %11 : vector<8x8x128xf32>
    %c0_13 = arith.constant 0 : index
    %c0_14 = arith.constant 0 : index
    %13 = vector.load %arg6[%c0_13, %c0_14] : memref<1x128xf32, #tpu.memory_space<vmem>>, vector<1x128xf32>
    %14 = vector.shape_cast %13 : vector<1x128xf32> to vector<1x1x128xf32>
    %15 = vector.broadcast %14 : vector<1x1x128xf32> to vector<8x8x128xf32>
    %16 = arith.addf %12, %15 : vector<8x8x128xf32>
    %17 = math.tanh %16 : vector<8x8x128xf32>
    %c0_15 = arith.constant 0 : index
    %c0_16 = arith.constant 0 : index
    %18 = vector.load %arg7[%c0_15, %c0_16] : memref<1x128xf32, #tpu.memory_space<vmem>>, vector<1x128xf32>
    %19 = vector.shape_cast %18 : vector<1x128xf32> to vector<1x1x128xf32>
    %20 = vector.broadcast %19 : vector<1x1x128xf32> to vector<8x8x128xf32>
    %21 = arith.mulf %17, %20 : vector<8x8x128xf32>
    %cst_17 = arith.constant dense<0.000000e+00> : vector<8x8xf32>
    %22 = vector.multi_reduction <add>, %21, %cst_17 [2] : vector<8x8x128xf32> to vector<8x8xf32>
    %c0_18 = arith.constant 0 : index
    %c0_19 = arith.constant 0 : index
    %23 = vector.load %arg8[%c0_18, %c0_19] : memref<1x1xf32, #tpu.memory_space<vmem>>, vector<1x1xf32>
    %24 = vector.broadcast %23 : vector<1x1xf32> to vector<8x8xf32>
    %25 = arith.addf %22, %24 : vector<8x8xf32>
    %cst_20 = arith.constant dense<0xFF800000> : vector<8xf32>
    %26 = vector.multi_reduction <maximumf>, %25, %cst_20 [1] : vector<8x8xf32> to vector<8xf32>
    %27 = vector.shape_cast %26 : vector<8xf32> to vector<8x1xf32>
    %28 = vector.broadcast %27 : vector<8x1xf32> to vector<8x8xf32>
    %29 = arith.subf %25, %28 : vector<8x8xf32>
    %30 = math.exp %29 : vector<8x8xf32>
    %cst_21 = arith.constant dense<0.000000e+00> : vector<8xf32>
    %31 = vector.multi_reduction <add>, %30, %cst_21 [1] : vector<8x8xf32> to vector<8xf32>
    %32 = vector.shape_cast %31 : vector<8xf32> to vector<8x1xf32>
    %33 = vector.broadcast %32 : vector<8x1xf32> to vector<8x8xf32>
    %34 = arith.divf %30, %33 : vector<8x8xf32>
    %35 = vector.shape_cast %34 : vector<8x8xf32> to vector<8x8x1xf32>
    %36 = vector.broadcast %35 : vector<8x8x1xf32> to vector<8x8x128xf32>
    %37 = arith.mulf %36, %4 : vector<8x8x128xf32>
    %cst_22 = arith.constant dense<0.000000e+00> : vector<8x128xf32>
    %38 = vector.multi_reduction <add>, %37, %cst_22 [1] : vector<8x8x128xf32> to vector<8x128xf32>
    %39 = tpu.concatenate %38, %1, %0 in 1 : vector<8x128xf32>, vector<8x128xf32>, vector<8x64xf32> -> vector<8x320xf32>
    %40 = arith.truncf %39 : vector<8x320xf32> to vector<8x320xbf16>
    %c0_23 = arith.constant 0 : index
    %c0_24 = arith.constant 0 : index
    %41 = vector.load %arg9[%c0_23, %c0_24] : memref<320x512xbf16, #tpu.memory_space<vmem>>, vector<320x512xbf16>
    %cst_25 = arith.constant dense<0.000000e+00> : vector<8x512xf32>
    %42 = tpu.matmul %40, %41, %cst_25 {dimension_numbers = #tpu.dot_dimension_numbers<[1], [0], [0], [1], [0, 0, 1, 1], [], []>} : vector<8x320xbf16>, vector<320x512xbf16>, vector<8x512xf32> -> vector<8x512xf32>
    %c0_26 = arith.constant 0 : index
    %c0_27 = arith.constant 0 : index
    %43 = vector.load %arg10[%c0_26, %c0_27] : memref<1x512xf32, #tpu.memory_space<vmem>>, vector<1x512xf32>
    %44 = vector.broadcast %43 : vector<1x512xf32> to vector<8x512xf32>
    %45 = arith.addf %42, %44 : vector<8x512xf32>
    %46 = vector.extract_strided_slice %45 {offsets = [0, 0], sizes = [8, 128], strides = [1, 1]} : vector<8x512xf32> to vector<8x128xf32>
    %47 = arith.negf %46 : vector<8x128xf32>
    %48 = math.exp %47 : vector<8x128xf32>
    %cst_28 = arith.constant 1.000000e+00 : f32
    %49 = vector.broadcast %cst_28 : f32 to vector<8x128xf32>
    %50 = arith.addf %49, %48 : vector<8x128xf32>
    %51 = arith.divf %49, %50 : vector<8x128xf32>
    %52 = vector.extract_strided_slice %45 {offsets = [0, 128], sizes = [8, 128], strides = [1, 1]} : vector<8x512xf32> to vector<8x128xf32>
    %53 = arith.negf %52 : vector<8x128xf32>
    %54 = math.exp %53 : vector<8x128xf32>
    %cst_29 = arith.constant 1.000000e+00 : f32
    %55 = vector.broadcast %cst_29 : f32 to vector<8x128xf32>
    %56 = arith.addf %55, %54 : vector<8x128xf32>
    %57 = arith.divf %55, %56 : vector<8x128xf32>
    %58 = vector.extract_strided_slice %45 {offsets = [0, 256], sizes = [8, 128], strides = [1, 1]} : vector<8x512xf32> to vector<8x128xf32>
    %59 = math.tanh %58 : vector<8x128xf32>
    %60 = vector.extract_strided_slice %45 {offsets = [0, 384], sizes = [8, 128], strides = [1, 1]} : vector<8x512xf32> to vector<8x128xf32>
    %61 = arith.negf %60 : vector<8x128xf32>
    %62 = math.exp %61 : vector<8x128xf32>
    %cst_30 = arith.constant 1.000000e+00 : f32
    %63 = vector.broadcast %cst_30 : f32 to vector<8x128xf32>
    %64 = arith.addf %63, %62 : vector<8x128xf32>
    %65 = arith.divf %63, %64 : vector<8x128xf32>
    %66 = arith.mulf %57, %2 : vector<8x128xf32>
    %67 = arith.mulf %51, %59 : vector<8x128xf32>
    %68 = arith.addf %66, %67 : vector<8x128xf32>
    %69 = math.tanh %68 : vector<8x128xf32>
    %70 = arith.mulf %65, %69 : vector<8x128xf32>
    %c0_31 = arith.constant 0 : index
    %c0_32 = arith.constant 0 : index
    %71 = vector.load %arg11[%c0_31, %c0_32] : memref<8x128xf32, #tpu.memory_space<vmem>>, vector<8x128xf32>
    tpu.vector_store %arg11[%c0_31, %c0_32], %70 {strides = array<i32>} : memref<8x128xf32, #tpu.memory_space<vmem>>, vector<8x128xf32>,
    %c0_33 = arith.constant 0 : index
    %c0_34 = arith.constant 0 : index
    %72 = vector.load %arg12[%c0_33, %c0_34] : memref<8x128xf32, #tpu.memory_space<vmem>>, vector<8x128xf32>
    tpu.vector_store %arg12[%c0_33, %c0_34], %68 {strides = array<i32>} : memref<8x128xf32, #tpu.memory_space<vmem>>, vector<8x128xf32>,
    return
  }
}

</mosaic_0001>

<llo_original>
// kernel: tpu_custom_call.1
$region0: #{tpu_custom_call.1}
  #allocation0 [shape = 'u32[]', space=smem, size = 0x4, offset = 0x4, fixed_abs, tag = 'smem constant byte address 0x4 - core index']
  #allocation1 [shape = 'u32[144,128]{1,0:T(1,128)}', space=vmem, size = 0x12000, scoped, tag = 'internal scratch']
  #allocation2 [shape = 'f32[1,1]{1,0:T(1,128)S(1)}', space=vmem, size = 0x200, scoped, tag = 'scoped memory for tpu_custom_call.1']
  %s0 = inlined_call_operand.hbm [shape: f32[8,64], index: 0, kind: input, shape index: {}]
  %s1 = inlined_call_operand.hbm [shape: f32[8,128], index: 1, kind: input, shape index: {}, may-alias: {1,11}]
  %s2 = inlined_call_operand.hbm [shape: f32[8,128], index: 2, kind: input, shape index: {}, may-alias: {2,12}]
  %s3 = inlined_call_operand.vmem [shape: bf16[8,8,128], index: 3, kind: input, shape index: {}]
  %s4 = inlined_call_operand.hbm [shape: bf16[8,8,128], index: 4, kind: input, shape index: {}]
  %s5 = inlined_call_operand.hbm [shape: bf16[128,128], index: 5, kind: input, shape index: {}]
  %s6 = inlined_call_operand.hbm [shape: f32[1,128], index: 6, kind: input, shape index: {}]
  %s7 = inlined_call_operand.hbm [shape: f32[1,128], index: 7, kind: input, shape index: {}]
  %s8 = inlined_call_operand.<no memory space> [shape: f32[1,1], index: 8, kind: input, shape index: {}]
  %s9 = inlined_call_operand.hbm [shape: bf16[320,512], index: 9, kind: input, shape index: {}]
  %s10 = inlined_call_operand.hbm [shape: f32[1,512], index: 10, kind: input, shape index: {}]
  %s11 = inlined_call_operand.hbm [shape: f32[8,128], index: 11, kind: output, shape index: {0}, may-alias: {1,11}]
  %s12 = inlined_call_operand.hbm [shape: f32[8,128], index: 12, kind: output, shape index: {1}, may-alias: {2,12}]
  %13 = xla_tuple %s11, %s12
  %s14 = sld [smem:[#allocation0]]
  $region98: #{tpu_custom_call.1} parent=0
    _
  %s16 = ssub.s32 1, %s14
  %s17 = scalar_select 0, %s16, %s14
  %v18 = vstv %s8
  %19 = vst [vmem:[#allocation2] sm:$0x1] %v18
  $region1: #{tpu_custom_call.1} parent=0
    #allocation3 [shape = 'u8[4096]{0}', space=vmem, size = 0x1000, scoped, tag = 'input window, operand 0, single buffered']
    #allocation4 [shape = 's32[1]{0}', space=sflag, size = 0x4, scoped, tag = 'scoped memory for tpu_custom_call.1']
    #allocation5 [shape = 's32[1]{0}', space=sflag, size = 0x4, scoped, tag = 'scoped memory for tpu_custom_call.1']
    #allocation6 [shape = 'u8[4096]{0}', space=vmem, size = 0x1000, scoped, tag = 'input window, operand 1, single buffered']
    #allocation7 [shape = 's32[1]{0}', space=sflag, size = 0x4, scoped, tag = 'scoped memory for tpu_custom_call.1']
    #allocation8 [shape = 'u8[4096]{0}', space=vmem, size = 0x1000, scoped, tag = 'input window, operand 2, single buffered']
    #allocation9 [shape = 'u8[16384]{0}', space=vmem, size = 0x4000, scoped, tag = 'input window, operand 4, single buffered']
    #allocation10 [shape = 's32[1]{0}', space=sflag, size = 0x4, scoped, tag = 'scoped memory for tpu_custom_call.1']
    #allocation11 [shape = 'u8[32768]{0}', space=vmem, size = 0x8000, scoped, tag = 'input window, operand 5, single buffered']
    #allocation12 [shape = 'u8[512]{0}', space=vmem, size = 0x400, scoped, tag = 'input window, operand 6, single buffered']
    #allocation13 [shape = 's32[1]{0}', space=sflag, size = 0x4, scoped, tag = 'scoped memory for tpu_custom_call.1']
    #allocation14 [shape = 'u8[512]{0}', space=vmem, size = 0x400, scoped, tag = 'input window, operand 7, single buffered']
    #allocation15 [shape = 'u8[327680]{0}', space=vmem, size = 0x50000, scoped, tag = 'input window, operand 9, single buffered']
    #allocation16 [shape = 's32[1]{0}', space=sflag, size = 0x4, scoped, tag = 'scoped memory for tpu_custom_call.1']
    #allocation17 [shape = 'u8[2048]{0}', space=vmem, size = 0x800, scoped, tag = 'input window, operand 10, single buffered']
    #allocation18 [shape = 'u8[4096]{0}', space=vmem, size = 0x1000, scoped, tag = 'output window, operand 0, single buffered']
    #allocation19 [shape = 'u8[4096]{0}', space=vmem, size = 0x1000, scoped, tag = 'output window, operand 1, single buffered']
    #allocation20 [shape = 's32[1]{0}', space=sflag, size = 0x4, scoped, tag = 'scoped memory for tpu_custom_call.1']
    %20 = vsyncpa [#allocation4], 0
    %21 = vsyncpa [#allocation7], 0
    %22 = vsyncpa [#allocation10], 0
    %23 = vsyncpa [#allocation13], 0
    %24 = vsyncpa [#allocation16], 0
    %25 = vsyncpa [#allocation5], 0
    %26 = vsyncpa [#allocation20], 0
    // Predicated region
    $region2: #{tpu_custom_call.1} parent=1 // pred_check
      _
    $region3: #{tpu_custom_call.1} parent=1 // pred_check_branch
      %28 = sbr.rel (0) target = $region5
    $region4: #{tpu_custom_call.1} parent=1 // pred_region
      %s30 = ssub.s32 128, 128
      %31 = vsyncadd [#allocation4], %s30
      %s33 = sshll.u32 [#allocation3], 4
      %s34 = int_to_ptr.vmem [resolvable:$true] %s33
      %36 = dma.hbm_to_vmem [thread:$0]  %s0, 128, %s34, [#allocation4]
    $region5: #{tpu_custom_call.1} parent=1 // pred_fallthru
      _
    // Predicated region
    $region6: #{tpu_custom_call.1} parent=1 // pred_check
      _
    $region7: #{tpu_custom_call.1} parent=1 // pred_check_branch
      %38 = sbr.rel (0) target = $region9
    $region8: #{tpu_custom_call.1} parent=1 // pred_region
      %s40 = ssub.s32 128, 128
      %41 = vsyncadd [#allocation7], %s40
      %s43 = sshll.u32 [#allocation6], 4
      %s44 = int_to_ptr.vmem [resolvable:$true] %s43
      %46 = dma.hbm_to_vmem [thread:$0]  %s1, 128, %s44, [#allocation7]
    $region9: #{tpu_custom_call.1} parent=1 // pred_fallthru
      _
    // Predicated region
    $region10: #{tpu_custom_call.1} parent=1 // pred_check
      _
    $region11: #{tpu_custom_call.1} parent=1 // pred_check_branch
      %48 = sbr.rel (0) target = $region13
    $region12: #{tpu_custom_call.1} parent=1 // pred_region
      %s50 = ssub.s32 128, 128
      %51 = vsyncadd [#allocation7], %s50
      %s53 = sshll.u32 [#allocation8], 4
      %s54 = int_to_ptr.vmem [resolvable:$true] %s53
      %56 = dma.hbm_to_vmem [thread:$0]  %s2, 128, %s54, [#allocation7]
    $region13: #{tpu_custom_call.1} parent=1 // pred_fallthru
      _
    // Predicated region
    $region14: #{tpu_custom_call.1} parent=1 // pred_check
      _
    $region15: #{tpu_custom_call.1} parent=1 // pred_check_branch
      %58 = sbr.rel (0) target = $region17
    $region16: #{tpu_custom_call.1} parent=1 // pred_region
      _
    $region17: #{tpu_custom_call.1} parent=1 // pred_fallthru
      _
    // Predicated region
    $region18: #{tpu_custom_call.1} parent=1 // pred_check
      _
    $region19: #{tpu_custom_call.1} parent=1 // pred_check_branch
      %60 = sbr.rel (0) target = $region21
    $region20: #{tpu_custom_call.1} parent=1 // pred_region
      %s62 = ssub.s32 512, 512
      %63 = vsyncadd [#allocation10], %s62
      %s64 = sshll.u32 [#allocation9], 4
      %s65 = int_to_ptr.vmem [resolvable:$true] %s64
      %70 = dma.hbm_to_vmem [thread:$0]  %s4, 512, %s65, [#allocation10], 64, 64, 4
    $region21: #{tpu_custom_call.1} parent=1 // pred_fallthru
      _
    // Predicated region
    $region22: #{tpu_custom_call.1} parent=1 // pred_check
      _
    $region23: #{tpu_custom_call.1} parent=1 // pred_check_branch
      %72 = sbr.rel (0) target = $region25
    $region24: #{tpu_custom_call.1} parent=1 // pred_region
      %s74 = ssub.s32 1024, 1024
      %75 = vsyncadd [#allocation10], %s74
      %s76 = sshll.u32 [#allocation11], 4
      %s77 = int_to_ptr.vmem [resolvable:$true] %s76
      %82 = dma.hbm_to_vmem [thread:$0]  %s5, 1024, %s77, [#allocation10], 64, 64, 4
    $region25: #{tpu_custom_call.1} parent=1 // pred_fallthru
      _
    // Predicated region
    $region26: #{tpu_custom_call.1} parent=1 // pred_check
      _
    $region27: #{tpu_custom_call.1} parent=1 // pred_check_branch
      %84 = sbr.rel (0) target = $region29
    $region28: #{tpu_custom_call.1} parent=1 // pred_region
      %s86 = ssub.s32 16, 16
      %87 = vsyncadd [#allocation13], %s86
      %s89 = sshll.u32 [#allocation12], 4
      %s90 = int_to_ptr.vmem [resolvable:$true] %s89
      %92 = dma.hbm_to_vmem [thread:$0]  %s6, 16, %s90, [#allocation13]
    $region29: #{tpu_custom_call.1} parent=1 // pred_fallthru
      _
    // Predicated region
    $region30: #{tpu_custom_call.1} parent=1 // pred_check
      _
    $region31: #{tpu_custom_call.1} parent=1 // pred_check_branch
      %94 = sbr.rel (0) target = $region33
    $region32: #{tpu_custom_call.1} parent=1 // pred_region
      %s96 = ssub.s32 16, 16
      %97 = vsyncadd [#allocation13], %s96
      %s99 = sshll.u32 [#allocation14], 4
      %s100 = int_to_ptr.vmem [resolvable:$true] %s99
      %102 = dma.hbm_to_vmem [thread:$0]  %s7, 16, %s100, [#allocation13]
    $region33: #{tpu_custom_call.1} parent=1 // pred_fallthru
      _
    // Predicated region
    $region34: #{tpu_custom_call.1} parent=1 // pred_check
      _
    $region35: #{tpu_custom_call.1} parent=1 // pred_check_branch
      %104 = sbr.rel (0) target = $region37
    $region36: #{tpu_custom_call.1} parent=1 // pred_region
      _
    $region37: #{tpu_custom_call.1} parent=1 // pred_fallthru
      _
    // Predicated region
    $region38: #{tpu_custom_call.1} parent=1 // pred_check
      _
    $region39: #{tpu_custom_call.1} parent=1 // pred_check_branch
      %106 = sbr.rel (0) target = $region41
    $region40: #{tpu_custom_call.1} parent=1 // pred_region
      %s108 = ssub.s32 10240, 10240
      %109 = vsyncadd [#allocation16], %s108
      %s110 = sshll.u32 [#allocation15], 4
      %s111 = int_to_ptr.vmem [resolvable:$true] %s110
      %116 = dma.hbm_to_vmem [thread:$0]  %s9, 10240, %s111, [#allocation16], 256, 256, 16
    $region41: #{tpu_custom_call.1} parent=1 // pred_fallthru
      _
    // Predicated region
    $region42: #{tpu_custom_call.1} parent=1 // pred_check
      _
    $region43: #{tpu_custom_call.1} parent=1 // pred_check_branch
      %118 = sbr.rel (0) target = $region45
    $region44: #{tpu_custom_call.1} parent=1 // pred_region
      %s120 = ssub.s32 64, 64
      %121 = vsyncadd [#allocation16], %s120
      %s123 = sshll.u32 [#allocation17], 4
      %s124 = int_to_ptr.vmem [resolvable:$true] %s123
      %126 = dma.hbm_to_vmem [thread:$0]  %s10, 64, %s124, [#allocation16]
    $region45: #{tpu_custom_call.1} parent=1 // pred_fallthru
      _
    // Predicated region
    $region46: #{tpu_custom_call.1} parent=1 // pred_check
      _
    $region47: #{tpu_custom_call.1} parent=1 // pred_check_branch
      %128 = sbr.rel (0) target = $region49
    $region48: #{tpu_custom_call.1} parent=1 // pred_region
      %129 = dma.done [#allocation4], 128
    $region49: #{tpu_custom_call.1} parent=1 // pred_fallthru
      _
    // Predicated region
    $region50: #{tpu_custom_call.1} parent=1 // pred_check
      _
    $region51: #{tpu_custom_call.1} parent=1 // pred_check_branch
      %131 = sbr.rel (0) target = $region53
    $region52: #{tpu_custom_call.1} parent=1 // pred_region
      %132 = dma.done [#allocation7], 128
    $region53: #{tpu_custom_call.1} parent=1 // pred_fallthru
      _
    // Predicated region
    $region54: #{tpu_custom_call.1} parent=1 // pred_check
      _
    $region55: #{tpu_custom_call.1} parent=1 // pred_check_branch
      %134 = sbr.rel (0) target = $region57
    $region56: #{tpu_custom_call.1} parent=1 // pred_region
      %135 = dma.done [#allocation7], 128
    $region57: #{tpu_custom_call.1} parent=1 // pred_fallthru
      _
    // Predicated region
    $region58: #{tpu_custom_call.1} parent=1 // pred_check
      _
    $region59: #{tpu_custom_call.1} parent=1 // pred_check_branch
      %137 = sbr.rel (0) target = $region61
    $region60: #{tpu_custom_call.1} parent=1 // pred_region
      %138 = dma.done [#allocation10], 512
    $region61: #{tpu_custom_call.1} parent=1 // pred_fallthru
      _
    // Predicated region
    $region62: #{tpu_custom_call.1} parent=1 // pred_check
      _
    $region63: #{tpu_custom_call.1} parent=1 // pred_check_branch
      %140 = sbr.rel (0) target = $region65
    $region64: #{tpu_custom_call.1} parent=1 // pred_region
      %141 = dma.done [#allocation10], 1024
    $region65: #{tpu_custom_call.1} parent=1 // pred_fallthru
      _
    // Predicated region
    $region66: #{tpu_custom_call.1} parent=1 // pred_check
      _
    $region67: #{tpu_custom_call.1} parent=1 // pred_check_branch
      %143 = sbr.rel (0) target = $region69
    $region68: #{tpu_custom_call.1} parent=1 // pred_region
      %144 = dma.done [#allocation13], 16
    $region69: #{tpu_custom_call.1} parent=1 // pred_fallthru
      _
    // Predicated region
    $region70: #{tpu_custom_call.1} parent=1 // pred_check
      _
    $region71: #{tpu_custom_call.1} parent=1 // pred_check_branch
      %146 = sbr.rel (0) target = $region73
    $region72: #{tpu_custom_call.1} parent=1 // pred_region
      %147 = dma.done [#allocation13], 16
    $region73: #{tpu_custom_call.1} parent=1 // pred_fallthru
      _
    // Predicated region
    $region74: #{tpu_custom_call.1} parent=1 // pred_check
      _
    $region75: #{tpu_custom_call.1} parent=1 // pred_check_branch
      %149 = sbr.rel (0) target = $region77
    $region76: #{tpu_custom_call.1} parent=1 // pred_region
      %150 = dma.done [#allocation16], 10240
    $region77: #{tpu_custom_call.1} parent=1 // pred_fallthru
      _
    // Predicated region
    $region78: #{tpu_custom_call.1} parent=1 // pred_check
      _
    $region79: #{tpu_custom_call.1} parent=1 // pred_check_branch
      %152 = sbr.rel (0) target = $region81
    $region80: #{tpu_custom_call.1} parent=1 // pred_region
      %153 = dma.done [#allocation16], 64
    $region81: #{tpu_custom_call.1} parent=1 // pred_fallthru
      _
    %v155 = vld [vmem:[#allocation3] sm:$0xff]
    %v156 = vld [vmem:[#allocation6] sm:$0xff]
    %v157 = vld [vmem:[#allocation8] sm:$0xff]
    %v158 = vld [vmem:[#allocation9] sm:$0xf]
    %v159 = vld [vmem:[#allocation9 + $0x4] sm:$0xf]
    %v160 = vld [vmem:[#allocation9 + $0x8] sm:$0xf]
    %v161 = vld [vmem:[#allocation9 + $0xc] sm:$0xf]
    %v162 = vld [vmem:[#allocation9 + $0x10] sm:$0xf]
    %v163 = vld [vmem:[#allocation9 + $0x14] sm:$0xf]
    %v164 = vld [vmem:[#allocation9 + $0x18] sm:$0xf]
    %v165 = vld [vmem:[#allocation9 + $0x1c] sm:$0xf]
    %v166 = vunpack.c.l.bf16 %v158
    %v167 = vunpack.c.l.bf16 %v159
    %v168 = vunpack.c.l.bf16 %v160
    %v169 = vunpack.c.l.bf16 %v161
    %v170 = vunpack.c.l.bf16 %v162
    %v171 = vunpack.c.l.bf16 %v163
    %v172 = vunpack.c.l.bf16 %v164
    %v173 = vunpack.c.l.bf16 %v165
    %v174 = vpack.c.bf16 %v156, %v156
    %v175 = vld [vmem:[#allocation11] sm:$0xf]
    %v176 = vld [vmem:[#allocation11 + $0x4] sm:$0xf]
    %v177 = vld [vmem:[#allocation11 + $0x8] sm:$0xf]
    %v178 = vld [vmem:[#allocation11 + $0xc] sm:$0xf]
    %v179 = vld [vmem:[#allocation11 + $0x10] sm:$0xf]
    %v180 = vld [vmem:[#allocation11 + $0x14] sm:$0xf]
    %v181 = vld [vmem:[#allocation11 + $0x18] sm:$0xf]
    %v182 = vld [vmem:[#allocation11 + $0x1c] sm:$0xf]
    %v183 = vld [vmem:[#allocation11 + $0x20] sm:$0xf]
    %v184 = vld [vmem:[#allocation11 + $0x24] sm:$0xf]
    %v185 = vld [vmem:[#allocation11 + $0x28] sm:$0xf]
    %v186 = vld [vmem:[#allocation11 + $0x2c] sm:$0xf]
    %v187 = vld [vmem:[#allocation11 + $0x30] sm:$0xf]
    %v188 = vld [vmem:[#allocation11 + $0x34] sm:$0xf]
    %v189 = vld [vmem:[#allocation11 + $0x38] sm:$0xf]
    %v190 = vld [vmem:[#allocation11 + $0x3c] sm:$0xf]
    %v207 = vunpack.c.l.b16 %v175
    %v208 = vunpack.c.l.b16 %v176
    %v209 = vunpack.c.l.b16 %v177
    %v210 = vunpack.c.l.b16 %v178
    %v211 = vunpack.c.l.b16 %v179
    %v212 = vunpack.c.l.b16 %v180
    %v213 = vunpack.c.l.b16 %v181
    %v214 = vunpack.c.l.b16 %v182
    %v215 = vunpack.c.l.b16 %v183
    %v216 = vunpack.c.l.b16 %v184
    %v217 = vunpack.c.l.b16 %v185
    %v218 = vunpack.c.l.b16 %v186
    %v219 = vunpack.c.l.b16 %v187
    %v220 = vunpack.c.l.b16 %v188
    %v221 = vunpack.c.l.b16 %v189
    %v222 = vunpack.c.l.b16 %v190
    %v223 = vpack.c.b16 %v208, %v207
    %v224 = vpack.c.b16 %v210, %v209
    %v225 = vpack.c.b16 %v212, %v211
    %v226 = vpack.c.b16 %v214, %v213
    %v227 = vpack.c.b16 %v216, %v215
    %v228 = vpack.c.b16 %v218, %v217
    %v229 = vpack.c.b16 %v220, %v219
    %v230 = vpack.c.b16 %v222, %v221
    %239 = vmatprep.subr.bf16.mxu0 0
    %240 = vmatpush1.bf16.msra.mxu0 %v230
    %241 = vmatprep.subr.bf16.mxu0 0
    %242 = vmatpush1.bf16.msra.mxu0 %v229
    %243 = vmatprep.subr.bf16.mxu0 0
    %244 = vmatpush1.bf16.msra.mxu0 %v228
    %245 = vmatprep.subr.bf16.mxu0 0
    %246 = vmatpush1.bf16.msra.mxu0 %v227
    %247 = vmatprep.subr.bf16.mxu0 0
    %248 = vmatpush1.bf16.msra.mxu0 %v226
    %249 = vmatprep.subr.bf16.mxu0 0
    %250 = vmatpush1.bf16.msra.mxu0 %v225
    %251 = vmatprep.subr.bf16.mxu0 0
    %252 = vmatpush1.bf16.msra.mxu0 %v224
    %253 = vmatprep.subr.bf16.mxu0 0
    %254 = vmatpush1.bf16.msra.mxu0 %v223
    %255 = vmatprep.subr.bf16.mxu0 0
    %256 = vmatpush2.bf16.msra.mxu0 0
    %257 = vmatprep.subr.bf16.mxu0 0
    %258 = vmatpush2.bf16.msra.mxu0 0
    %259 = vmatprep.subr.bf16.mxu0 0
    %260 = vmatpush2.bf16.msra.mxu0 0
    %261 = vmatprep.subr.bf16.mxu0 0
    %262 = vmatpush2.bf16.msra.mxu0 0
    %263 = vmatprep.subr.bf16.mxu0 0
    %264 = vmatpush2.bf16.msra.mxu0 0
    %265 = vmatprep.subr.bf16.mxu0 0
    %266 = vmatpush2.bf16.msra.mxu0 0
    %267 = vmatprep.subr.bf16.mxu0 0
    %268 = vmatpush2.bf16.msra.mxu0 0
    %269 = vmatprep.subr.bf16.mxu0 0
    %270 = vmatpush2.bf16.msra.mxu0 0
    %271 = vmatprep.mubr.bf16.mxu0 0
    %272 = vmatmul.mubr.bf16.gmra.mxu0 %v174
    %v273 = vpop.f32.mrf.mxu0
    %v274 = vadd.f32 0.0, %v273
    %v275 = vpop.f32.mrf.mxu0
    %v276 = vpop.f32.mrf.mxu0
    %v277 = vpop.f32.mrf.mxu0
    %278 = vdwg.mxu0
    %v279 = vld [vmem:[%s3] sm:$0xf]
    %v280 = vld [vmem:[%s3 + $0x4] sm:$0xf]
    %v281 = vld [vmem:[%s3 + $0x8] sm:$0xf]
    %v282 = vld [vmem:[%s3 + $0xc] sm:$0xf]
    %v283 = vld [vmem:[%s3 + $0x10] sm:$0xf]
    %v284 = vld [vmem:[%s3 + $0x14] sm:$0xf]
    %v285 = vld [vmem:[%s3 + $0x18] sm:$0xf]
    %v286 = vld [vmem:[%s3 + $0x1c] sm:$0xf]
    %v287 = vunpack.c.l.bf16 %v279
    %v288 = vunpack.c.l.bf16 %v280
    %v289 = vunpack.c.l.bf16 %v281
    %v290 = vunpack.c.l.bf16 %v282
    %v291 = vunpack.c.l.bf16 %v283
    %v292 = vunpack.c.l.bf16 %v284
    %v293 = vunpack.c.l.bf16 %v285
    %v294 = vunpack.c.l.bf16 %v286
    %v296 = vcombine.high %v274, %v274
    %v298 = vunpack.c.l.s4 1966171168
    %v299 = vunpack.c.0.s8 %v298
    %v300 = vlaneseq
    %v301 = vshrl.u32 %v300, 7
    %v302 = vsub.s32 %v299, %v301
    %v303 = vrot.slane %v274, %v302
    %v305 = vunpack.c.l.s4 1966171168
    %v306 = vunpack.c.0.s8 %v305
    %v307 = vlaneseq
    %v308 = vshrl.u32 %v307, 7
    %v309 = vsub.s32 %v306, %v308
    %v310 = vrot.slane %v296, %v309
    %v311 = vcombine.high %v303, %v303
    %v312 = vcombine.high %v310, %v310
    %v314 = vunpack.c.l.s4 1966171168
    %v315 = vunpack.c.0.s8 %v314
    %v316 = vlaneseq
    %v317 = vshrl.u32 %v316, 7
    %v318 = vsub.s32 %v315, %v317
    %v319 = vrot.slane %v303, %v318
    %v321 = vunpack.c.l.s4 1966171168
    %v322 = vunpack.c.0.s8 %v321
    %v323 = vlaneseq
    %v324 = vshrl.u32 %v323, 7
    %v325 = vsub.s32 %v322, %v324
    %v326 = vrot.slane %v310, %v325
    %v328 = vunpack.c.l.s4 1966171168
    %v329 = vunpack.c.0.s8 %v328
    %v330 = vlaneseq
    %v331 = vshrl.u32 %v330, 7
    %v332 = vsub.s32 %v329, %v331
    %v333 = vrot.slane %v311, %v332
    %v335 = vunpack.c.l.s4 1966171168
    %v336 = vunpack.c.0.s8 %v335
    %v337 = vlaneseq
    %v338 = vshrl.u32 %v337, 7
    %v339 = vsub.s32 %v336, %v338
    %v340 = vrot.slane %v312, %v339
    %v341 = vcombine.high %v319, %v319
    %v342 = vcombine.high %v326, %v326
    %v343 = vcombine.high %v333, %v333
    %v344 = vcombine.high %v340, %v340
    %v345 = vlaneseq
    %v346 = vshrl.u32 %v345, 7
    %v347 = vsub.s32 0, %v346
    %v348 = vrot.slane %v319, %v347
    %v349 = vlaneseq
    %v350 = vshrl.u32 %v349, 7
    %v351 = vsub.s32 0, %v350
    %v352 = vrot.slane %v333, %v351
    %v353 = vlaneseq
    %v354 = vshrl.u32 %v353, 7
    %v355 = vsub.s32 0, %v354
    %v356 = vrot.slane %v341, %v355
    %v357 = vlaneseq
    %v358 = vshrl.u32 %v357, 7
    %v359 = vsub.s32 0, %v358
    %v360 = vrot.slane %v343, %v359
    %v361 = vlaneseq
    %v362 = vshrl.u32 %v361, 7
    %v363 = vsub.s32 0, %v362
    %v364 = vrot.slane %v326, %v363
    %v365 = vlaneseq
    %v366 = vshrl.u32 %v365, 7
    %v367 = vsub.s32 0, %v366
    %v368 = vrot.slane %v340, %v367
    %v369 = vlaneseq
    %v370 = vshrl.u32 %v369, 7
    %v371 = vsub.s32 0, %v370
    %v372 = vrot.slane %v342, %v371
    %v373 = vlaneseq
    %v374 = vshrl.u32 %v373, 7
    %v375 = vsub.s32 0, %v374
    %v376 = vrot.slane %v344, %v375
    %v385 = vadd.f32 %v287, %v348
    %v386 = vadd.f32 %v288, %v352
    %v387 = vadd.f32 %v289, %v356
    %v388 = vadd.f32 %v290, %v360
    %v389 = vadd.f32 %v291, %v364
    %v390 = vadd.f32 %v292, %v368
    %v391 = vadd.f32 %v293, %v372
    %v392 = vadd.f32 %v294, %v376
    %v393 = vld [vmem:[#allocation12] sm:$0x1]
    %v395 = vlaneseq
    %v396 = vshrl.u32 %v395, 7
    %v397 = vsub.s32 0, %v396
    %v398 = vrot.slane %v393, %v397
    %v400 = vadd.f32 %v385, %v398
    %v401 = vadd.f32 %v386, %v398
    %v402 = vadd.f32 %v387, %v398
    %v403 = vadd.f32 %v388, %v398
    %v404 = vadd.f32 %v389, %v398
    %v405 = vadd.f32 %v390, %v398
    %v406 = vadd.f32 %v391, %v398
    %v407 = vadd.f32 %v392, %v398
    %v408 = vtanh.pop %v400
    %v409 = vtanh.pop %v401
    %v410 = vtanh.pop %v402
    %v411 = vtanh.pop %v403
    %v412 = vtanh.pop %v404
    %v413 = vtanh.pop %v405
    %v414 = vtanh.pop %v406
    %v415 = vtanh.pop %v407
    %v416 = vld [vmem:[#allocation14] sm:$0x1]
    %v418 = vlaneseq
    %v419 = vshrl.u32 %v418, 7
    %v420 = vsub.s32 0, %v419
    %v421 = vrot.slane %v416, %v420
    %v423 = vmul.f32 %v408, %v421
    %v424 = vmul.f32 %v409, %v421
    %v425 = vmul.f32 %v410, %v421
    %v426 = vmul.f32 %v411, %v421
    %v427 = vmul.f32 %v412, %v421
    %v428 = vmul.f32 %v413, %v421
    %v429 = vmul.f32 %v414, %v421
    %v430 = vmul.f32 %v415, %v421
    %431 = vadd.xlane.f32.xlu0 %v423
    %v432 = vpop.xlane.xlu0 %431
    %433 = vadd.xlane.f32.xlu0 %v424
    %v434 = vpop.xlane.xlu0 %433
    %435 = vadd.xlane.f32.xlu0 %v425
    %v436 = vpop.xlane.xlu0 %435
    %437 = vadd.xlane.f32.xlu0 %v426
    %v438 = vpop.xlane.xlu0 %437
    %439 = vadd.xlane.f32.xlu0 %v427
    %v440 = vpop.xlane.xlu0 %439
    %441 = vadd.xlane.f32.xlu0 %v428
    %v442 = vpop.xlane.xlu0 %441
    %443 = vadd.xlane.f32.xlu0 %v429
    %v444 = vpop.xlane.xlu0 %443
    %445 = vadd.xlane.f32.xlu0 %v430
    %v446 = vpop.xlane.xlu0 %445
    %v447 = vld [vmem:[#allocation2] sm:$0x1]
    %v449 = vlaneseq
    %v450 = vshrl.u32 %v449, 7
    %v451 = vsub.s32 0, %v450
    %v452 = vrot.slane %v447, %v451
    %453 = vset.pattern.permute.xlu0 0
    %454 = vperm.xlu0 %453, %v452
    %v455 = vpop.permute.xlu0 %454
    %v457 = vadd.f32 %v432, %v455
    %v458 = vadd.f32 %v434, %v455
    %v459 = vadd.f32 %v436, %v455
    %v460 = vadd.f32 %v438, %v455
    %v461 = vadd.f32 %v440, %v455
    %v462 = vadd.f32 %v442, %v455
    %v463 = vadd.f32 %v444, %v455
    %v464 = vadd.f32 %v446, %v455
    %v473 = vlaneseq
    %v474 = vand.u32 %v473, 127
    %v475 = vlaneseq
    %v476 = vshrl.u32 %v475, 7
    %v477 = vsub.s32 %v474, %v476
    %v478 = vrot.slane %v457, %v477
    %v479 = vlaneseq
    %v480 = vshrl.u32 %v479, 7
    %v481 = vsub.s32 %v474, %v480
    %v482 = vrot.slane %v458, %v481
    %v483 = vlaneseq
    %v484 = vshrl.u32 %v483, 7
    %v485 = vsub.s32 %v474, %v484
    %v486 = vrot.slane %v459, %v485
    %v487 = vlaneseq
    %v488 = vshrl.u32 %v487, 7
    %v489 = vsub.s32 %v474, %v488
    %v490 = vrot.slane %v460, %v489
    %v491 = vlaneseq
    %v492 = vshrl.u32 %v491, 7
    %v493 = vsub.s32 %v474, %v492
    %v494 = vrot.slane %v461, %v493
    %v495 = vlaneseq
    %v496 = vshrl.u32 %v495, 7
    %v497 = vsub.s32 %v474, %v496
    %v498 = vrot.slane %v462, %v497
    %v499 = vlaneseq
    %v500 = vshrl.u32 %v499, 7
    %v501 = vsub.s32 %v474, %v500
    %v502 = vrot.slane %v463, %v501
    %v503 = vlaneseq
    %v504 = vshrl.u32 %v503, 7
    %v505 = vsub.s32 %v474, %v504
    %v506 = vrot.slane %v464, %v505
    %vm507 = vcmask 1041409
    %v508 = vsel %vm507, %v482, %v478
    %vm509 = vcmask 1042434
    %v510 = vsel %vm509, %v486, %v508
    %vm511 = vcmask 1043459
    %v512 = vsel %vm511, %v490, %v510
    %vm513 = vcmask 1044484
    %v514 = vsel %vm513, %v494, %v512
    %vm515 = vcmask 1045509
    %v516 = vsel %vm515, %v498, %v514
    %vm517 = vcmask 1046534
    %v518 = vsel %vm517, %v502, %v516
    %vm519 = vcmask 1047559
    %v520 = vsel %vm519, %v506, %v518
    %vm522 = vcmask 64512
    %v523 = vsel %vm522, %v520, -inf
    %524 = vmax.xlane.f32.xlu0 %v523
    %v525 = vpop.xlane.xlu0 %524
    %v527 = vlaneseq
    %v528 = vshrl.u32 %v527, 7
    %v529 = vsub.s32 0, %v528
    %v530 = vrot.slane %v525, %v529
    %v531 = vlaneseq
    %v532 = vshrl.u32 %v531, 7
    %v533 = vsub.s32 1, %v532
    %v534 = vrot.slane %v525, %v533
    %v535 = vlaneseq
    %v536 = vshrl.u32 %v535, 7
    %v537 = vsub.s32 2, %v536
    %v538 = vrot.slane %v525, %v537
    %v539 = vlaneseq
    %v540 = vshrl.u32 %v539, 7
    %v541 = vsub.s32 3, %v540
    %v542 = vrot.slane %v525, %v541
    %v543 = vlaneseq
    %v544 = vshrl.u32 %v543, 7
    %v545 = vsub.s32 4, %v544
    %v546 = vrot.slane %v525, %v545
    %v547 = vlaneseq
    %v548 = vshrl.u32 %v547, 7
    %v549 = vsub.s32 5, %v548
    %v550 = vrot.slane %v525, %v549
    %v551 = vlaneseq
    %v552 = vshrl.u32 %v551, 7
    %v553 = vsub.s32 6, %v552
    %v554 = vrot.slane %v525, %v553
    %v555 = vlaneseq
    %v556 = vshrl.u32 %v555, 7
    %v557 = vsub.s32 7, %v556
    %v558 = vrot.slane %v525, %v557
    %v567 = vsub.f32 %v457, %v530
    %v568 = vsub.f32 %v458, %v534
    %v569 = vsub.f32 %v459, %v538
    %v570 = vsub.f32 %v460, %v542
    %v571 = vsub.f32 %v461, %v546
    %v572 = vsub.f32 %v462, %v550
    %v573 = vsub.f32 %v463, %v554
    %v574 = vsub.f32 %v464, %v558
    %v575 = vmul.f32 %v567, 1.442695
    %v576 = vpow.pop %v575
    %v577 = vmul.f32 %v568, 1.442695
    %v578 = vpow.pop %v577
    %v579 = vmul.f32 %v569, 1.442695
    %v580 = vpow.pop %v579
    %v581 = vmul.f32 %v570, 1.442695
    %v582 = vpow.pop %v581
    %v583 = vmul.f32 %v571, 1.442695
    %v584 = vpow.pop %v583
    %v585 = vmul.f32 %v572, 1.442695
    %v586 = vpow.pop %v585
    %v587 = vmul.f32 %v573, 1.442695
    %v588 = vpow.pop %v587
    %v589 = vmul.f32 %v574, 1.442695
    %v590 = vpow.pop %v589
    %599 = vset.pattern.permute.xlu0 0
    %600 = vperm.xlu0 %599, %v576
    %v601 = vpop.permute.xlu0 %600
    %602 = vset.pattern.permute.xlu0 0
    %603 = vperm.xlu0 %602, %v578
    %v604 = vpop.permute.xlu0 %603
    %605 = vset.pattern.permute.xlu0 0
    %606 = vperm.xlu0 %605, %v580
    %v607 = vpop.permute.xlu0 %606
    %608 = vset.pattern.permute.xlu0 0
    %609 = vperm.xlu0 %608, %v582
    %v610 = vpop.permute.xlu0 %609
    %611 = vset.pattern.permute.xlu0 0
    %612 = vperm.xlu0 %611, %v584
    %v613 = vpop.permute.xlu0 %612
    %614 = vset.pattern.permute.xlu0 0
    %615 = vperm.xlu0 %614, %v586
    %v616 = vpop.permute.xlu0 %615
    %617 = vset.pattern.permute.xlu0 0
    %618 = vperm.xlu0 %617, %v588
    %v619 = vpop.permute.xlu0 %618
    %620 = vset.pattern.permute.xlu0 0
    %621 = vperm.xlu0 %620, %v590
    %v622 = vpop.permute.xlu0 %621
    %v623 = vlaneseq
    %v624 = vshrl.u32 %v623, 7
    %v625 = vsub.s32 %v474, %v624
    %v626 = vrot.slane %v601, %v625
    %v627 = vlaneseq
    %v628 = vshrl.u32 %v627, 7
    %v629 = vsub.s32 %v474, %v628
    %v630 = vrot.slane %v604, %v629
    %v631 = vlaneseq
    %v632 = vshrl.u32 %v631, 7
    %v633 = vsub.s32 %v474, %v632
    %v634 = vrot.slane %v607, %v633
    %v635 = vlaneseq
    %v636 = vshrl.u32 %v635, 7
    %v637 = vsub.s32 %v474, %v636
    %v638 = vrot.slane %v610, %v637
    %v639 = vlaneseq
    %v640 = vshrl.u32 %v639, 7
    %v641 = vsub.s32 %v474, %v640
    %v642 = vrot.slane %v613, %v641
    %v643 = vlaneseq
    %v644 = vshrl.u32 %v643, 7
    %v645 = vsub.s32 %v474, %v644
    %v646 = vrot.slane %v616, %v645
    %v647 = vlaneseq
    %v648 = vshrl.u32 %v647, 7
    %v649 = vsub.s32 %v474, %v648
    %v650 = vrot.slane %v619, %v649
    %v651 = vlaneseq
    %v652 = vshrl.u32 %v651, 7
    %v653 = vsub.s32 %v474, %v652
    %v654 = vrot.slane %v622, %v653
    %v655 = vsel %vm507, %v630, %v626
    %v656 = vsel %vm509, %v634, %v655
    %v657 = vsel %vm511, %v638, %v656
    %v658 = vsel %vm513, %v642, %v657
    %v659 = vsel %vm515, %v646, %v658
    %v660 = vsel %vm517, %v650, %v659
    %v661 = vsel %vm519, %v654, %v660
    %v663 = vsel %vm522, %v661, 0.0
    %664 = vadd.xlane.f32.xlu0 %v663
    %v665 = vpop.xlane.xlu0 %664
    %v667 = vlaneseq
    %v668 = vshrl.u32 %v667, 7
    %v669 = vsub.s32 0, %v668
    %v670 = vrot.slane %v665, %v669
    %v671 = vlaneseq
    %v672 = vshrl.u32 %v671, 7
    %v673 = vsub.s32 1, %v672
    %v674 = vrot.slane %v665, %v673
    %v675 = vlaneseq
    %v676 = vshrl.u32 %v675, 7
    %v677 = vsub.s32 2, %v676
    %v678 = vrot.slane %v665, %v677
    %v679 = vlaneseq
    %v680 = vshrl.u32 %v679, 7
    %v681 = vsub.s32 3, %v680
    %v682 = vrot.slane %v665, %v681
    %v683 = vlaneseq
    %v684 = vshrl.u32 %v683, 7
    %v685 = vsub.s32 4, %v684
    %v686 = vrot.slane %v665, %v685
    %v687 = vlaneseq
    %v688 = vshrl.u32 %v687, 7
    %v689 = vsub.s32 5, %v688
    %v690 = vrot.slane %v665, %v689
    %v691 = vlaneseq
    %v692 = vshrl.u32 %v691, 7
    %v693 = vsub.s32 6, %v692
    %v694 = vrot.slane %v665, %v693
    %v695 = vlaneseq
    %v696 = vshrl.u32 %v695, 7
    %v697 = vsub.s32 7, %v696
    %v698 = vrot.slane %v665, %v697
    %v707 = vrcp.pop %v670
    %v708 = vmul.f32 %v576, %v707
    %v709 = vrcp.pop %v674
    %v710 = vmul.f32 %v578, %v709
    %v711 = vrcp.pop %v678
    %v712 = vmul.f32 %v580, %v711
    %v713 = vrcp.pop %v682
    %v714 = vmul.f32 %v582, %v713
    %v715 = vrcp.pop %v686
    %v716 = vmul.f32 %v584, %v715
    %v717 = vrcp.pop %v690
    %v718 = vmul.f32 %v586, %v717
    %v719 = vrcp.pop %v694
    %v720 = vmul.f32 %v588, %v719
    %v721 = vrcp.pop %v698
    %v722 = vmul.f32 %v590, %v721
    %724 = vset.pattern.permute.xlu0 0
    %725 = vperm.xlu0 %724, %v708
    %v726 = vpop.permute.xlu0 %725
    %729 = vset.pattern.permute.xlu0 0
    %730 = vperm.xlu0 %729, %v710
    %v731 = vpop.permute.xlu0 %730
    %734 = vset.pattern.permute.xlu0 0
    %735 = vperm.xlu0 %734, %v712
    %v736 = vpop.permute.xlu0 %735
    %739 = vset.pattern.permute.xlu0 0
    %740 = vperm.xlu0 %739, %v714
    %v741 = vpop.permute.xlu0 %740
    %744 = vset.pattern.permute.xlu0 0
    %745 = vperm.xlu0 %744, %v716
    %v746 = vpop.permute.xlu0 %745
    %749 = vset.pattern.permute.xlu0 0
    %750 = vperm.xlu0 %749, %v718
    %v751 = vpop.permute.xlu0 %750
    %754 = vset.pattern.permute.xlu0 0
    %755 = vperm.xlu0 %754, %v720
    %v756 = vpop.permute.xlu0 %755
    %759 = vset.pattern.permute.xlu0 0
    %760 = vperm.xlu0 %759, %v722
    %v761 = vpop.permute.xlu0 %760
    %v763 = vmul.f32 %v726, %v166
    %v764 = vmul.f32 %v731, %v167
    %v765 = vmul.f32 %v736, %v168
    %v766 = vmul.f32 %v741, %v169
    %v767 = vmul.f32 %v746, %v170
    %v768 = vmul.f32 %v751, %v171
    %v769 = vmul.f32 %v756, %v172
    %v770 = vmul.f32 %v761, %v173
    %v771 = vrot.slane %v763, 4
    %v772 = vadd.f32 %v763, %v771
    %v773 = vrot.slane %v772, 2
    %v774 = vadd.f32 %v772, %v773
    %v775 = vrot.slane %v774, 1
    %v776 = vadd.f32 %v774, %v775
    %v777 = vrot.slane %v764, 4
    %v778 = vadd.f32 %v764, %v777
    %v779 = vrot.slane %v778, 2
    %v780 = vadd.f32 %v778, %v779
    %v781 = vrot.slane %v780, 1
    %v782 = vadd.f32 %v780, %v781
    %v783 = vrot.slane %v765, 4
    %v784 = vadd.f32 %v765, %v783
    %v785 = vrot.slane %v784, 2
    %v786 = vadd.f32 %v784, %v785
    %v787 = vrot.slane %v786, 1
    %v788 = vadd.f32 %v786, %v787
    %v789 = vrot.slane %v766, 4
    %v790 = vadd.f32 %v766, %v789
    %v791 = vrot.slane %v790, 2
    %v792 = vadd.f32 %v790, %v791
    %v793 = vrot.slane %v792, 1
    %v794 = vadd.f32 %v792, %v793
    %v795 = vrot.slane %v767, 4
    %v796 = vadd.f32 %v767, %v795
    %v797 = vrot.slane %v796, 2
    %v798 = vadd.f32 %v796, %v797
    %v799 = vrot.slane %v798, 1
    %v800 = vadd.f32 %v798, %v799
    %v801 = vrot.slane %v768, 4
    %v802 = vadd.f32 %v768, %v801
    %v803 = vrot.slane %v802, 2
    %v804 = vadd.f32 %v802, %v803
    %v805 = vrot.slane %v804, 1
    %v806 = vadd.f32 %v804, %v805
    %v807 = vrot.slane %v769, 4
    %v808 = vadd.f32 %v769, %v807
    %v809 = vrot.slane %v808, 2
    %v810 = vadd.f32 %v808, %v809
    %v811 = vrot.slane %v810, 1
    %v812 = vadd.f32 %v810, %v811
    %v813 = vrot.slane %v770, 4
    %v814 = vadd.f32 %v770, %v813
    %v815 = vrot.slane %v814, 2
    %v816 = vadd.f32 %v814, %v815
    %v817 = vrot.slane %v816, 1
    %v818 = vadd.f32 %v816, %v817
    %v827 = vsel %vm507, %v782, %v776
    %v828 = vsel %vm509, %v788, %v827
    %v829 = vsel %vm511, %v794, %v828
    %v830 = vsel %vm513, %v800, %v829
    %v831 = vsel %vm515, %v806, %v830
    %v832 = vsel %vm517, %v812, %v831
    %v833 = vsel %vm519, %v818, %v832
    %v835 = vpack.c.bf16 %v833, %v833
    %v836 = vpack.c.bf16 %v155, %v155
    %v837 = vld [vmem:[#allocation15] sm:$0xff]
    %v838 = vld [vmem:[#allocation15 + $0x8] sm:$0xff]
    %v839 = vld [vmem:[#allocation15 + $0x10] sm:$0xff]
    %v840 = vld [vmem:[#allocation15 + $0x18] sm:$0xff]
    %v841 = vld [vmem:[#allocation15 + $0x20] sm:$0xff]
    %v842 = vld [vmem:[#allocation15 + $0x28] sm:$0xff]
    %v843 = vld [vmem:[#allocation15 + $0x30] sm:$0xff]
    %v844 = vld [vmem:[#allocation15 + $0x38] sm:$0xff]
    %v845 = vld [vmem:[#allocation15 + $0x40] sm:$0xff]
    %v846 = vld [vmem:[#allocation15 + $0x48] sm:$0xff]
    %v847 = vld [vmem:[#allocation15 + $0x50] sm:$0xff]
    %v848 = vld [vmem:[#allocation15 + $0x58] sm:$0xff]
    %v849 = vld [vmem:[#allocation15 + $0x60] sm:$0xff]
    %v850 = vld [vmem:[#allocation15 + $0x68] sm:$0xff]
    %v851 = vld [vmem:[#allocation15 + $0x70] sm:$0xff]
    %v852 = vld [vmem:[#allocation15 + $0x78] sm:$0xff]
    %v853 = vld [vmem:[#allocation15 + $0x80] sm:$0xff]
    %v854 = vld [vmem:[#allocation15 + $0x88] sm:$0xff]
    %v855 = vld [vmem:[#allocation15 + $0x90] sm:$0xff]
    %v856 = vld [vmem:[#allocation15 + $0x98] sm:$0xff]
    %v857 = vld [vmem:[#allocation15 + $0xa0] sm:$0xff]
    %v858 = vld [vmem:[#allocation15 + $0xa8] sm:$0xff]
    %v859 = vld [vmem:[#allocation15 + $0xb0] sm:$0xff]
    %v860 = vld [vmem:[#allocation15 + $0xb8] sm:$0xff]
    %v861 = vld [vmem:[#allocation15 + $0xc0] sm:$0xff]
    %v862 = vld [vmem:[#allocation15 + $0xc8] sm:$0xff]
    %v863 = vld [vmem:[#allocation15 + $0xd0] sm:$0xff]
    %v864 = vld [vmem:[#allocation15 + $0xd8] sm:$0xff]
    %v865 = vld [vmem:[#allocation15 + $0xe0] sm:$0xff]
    %v866 = vld [vmem:[#allocation15 + $0xe8] sm:$0xff]
    %v867 = vld [vmem:[#allocation15 + $0xf0] sm:$0xff]
    %v868 = vld [vmem:[#allocation15 + $0xf8] sm:$0xff]
    %v869 = vld [vmem:[#allocation15 + $0x100] sm:$0xff]
    %v870 = vld [vmem:[#allocation15 + $0x108] sm:$0xff]
    %v871 = vld [vmem:[#allocation15 + $0x110] sm:$0xff]
    %v872 = vld [vmem:[#allocation15 + $0x118] sm:$0xff]
    %v873 = vld [vmem:[#allocation15 + $0x120] sm:$0xff]
    %v874 = vld [vmem:[#allocation15 + $0x128] sm:$0xff]
    %v875 = vld [vmem:[#allocation15 + $0x130] sm:$0xff]
    %v876 = vld [vmem:[#allocation15 + $0x138] sm:$0xff]
    %v877 = vld [vmem:[#allocation15 + $0x140] sm:$0xff]
    %v878 = vld [vmem:[#allocation15 + $0x148] sm:$0xff]
    %v879 = vld [vmem:[#allocation15 + $0x150] sm:$0xff]
    %v880 = vld [vmem:[#allocation15 + $0x158] sm:$0xff]
    %v881 = vld [vmem:[#allocation15 + $0x160] sm:$0xff]
    %v882 = vld [vmem:[#allocation15 + $0x168] sm:$0xff]
    %v883 = vld [vmem:[#allocation15 + $0x170] sm:$0xff]
    %v884 = vld [vmem:[#allocation15 + $0x178] sm:$0xff]
    %v885 = vld [vmem:[#allocation15 + $0x180] sm:$0xff]
    %v886 = vld [vmem:[#allocation15 + $0x188] sm:$0xff]
    %v887 = vld [vmem:[#allocation15 + $0x190] sm:$0xff]
    %v888 = vld [vmem:[#allocation15 + $0x198] sm:$0xff]
    %v889 = vld [vmem:[#allocation15 + $0x1a0] sm:$0xff]
    %v890 = vld [vmem:[#allocation15 + $0x1a8] sm:$0xff]
    %v891 = vld [vmem:[#allocation15 + $0x1b0] sm:$0xff]
    %v892 = vld [vmem:[#allocation15 + $0x1b8] sm:$0xff]
    %v893 = vld [vmem:[#allocation15 + $0x1c0] sm:$0xff]
    %v894 = vld [vmem:[#allocation15 + $0x1c8] sm:$0xff]
    %v895 = vld [vmem:[#allocation15 + $0x1d0] sm:$0xff]
    %v896 = vld [vmem:[#allocation15 + $0x1d8] sm:$0xff]
    %v897 = vld [vmem:[#allocation15 + $0x1e0] sm:$0xff]
    %v898 = vld [vmem:[#allocation15 + $0x1e8] sm:$0xff]
    %v899 = vld [vmem:[#allocation15 + $0x1f0] sm:$0xff]
    %v900 = vld [vmem:[#allocation15 + $0x1f8] sm:$0xff]
    %v901 = vld [vmem:[#allocation15 + $0x200] sm:$0xff]
    %v902 = vld [vmem:[#allocation15 + $0x208] sm:$0xff]
    %v903 = vld [vmem:[#allocation15 + $0x210] sm:$0xff]
    %v904 = vld [vmem:[#allocation15 + $0x218] sm:$0xff]
    %v905 = vld [vmem:[#allocation15 + $0x220] sm:$0xff]
    %v906 = vld [vmem:[#allocation15 + $0x228] sm:$0xff]
    %v907 = vld [vmem:[#allocation15 + $0x230] sm:$0xff]
    %v908 = vld [vmem:[#allocation15 + $0x238] sm:$0xff]
    %v909 = vld [vmem:[#allocation15 + $0x240] sm:$0xff]
    %v910 = vld [vmem:[#allocation15 + $0x248] sm:$0xff]
    %v911 = vld [vmem:[#allocation15 + $0x250] sm:$0xff]
    %v912 = vld [vmem:[#allocation15 + $0x258] sm:$0xff]
    %v913 = vld [vmem:[#allocation15 + $0x260] sm:$0xff]
    %v914 = vld [vmem:[#allocation15 + $0x268] sm:$0xff]
    %v915 = vld [vmem:[#allocation15 + $0x270] sm:$0xff]
    %v916 = vld [vmem:[#allocation15 + $0x278] sm:$0xff]
    %v917 = vld [vmem:[#allocation17] sm:$0xf]
    %v919 = vlaneseq
    %v920 = vshrl.u32 %v919, 7
    %v921 = vsub.s32 0, %v920
    %v922 = vrot.slane %v917, %v921
    %v923 = vlaneseq
    %v924 = vshrl.u32 %v923, 7
    %v925 = vsub.s32 1, %v924
    %v926 = vrot.slane %v917, %v925
    %v927 = vlaneseq
    %v928 = vshrl.u32 %v927, 7
    %v929 = vsub.s32 2, %v928
    %v930 = vrot.slane %v917, %v929
    %v931 = vlaneseq
    %v932 = vshrl.u32 %v931, 7
    %v933 = vsub.s32 3, %v932
    %v934 = vrot.slane %v917, %v933
    %v1019 = vunpack.c.l.b16 %v837
    %v1020 = vunpack.c.h.b16 %v837
    %v1021 = vunpack.c.l.b16 %v838
    %v1022 = vunpack.c.h.b16 %v838
    %v1023 = vunpack.c.l.b16 %v839
    %v1024 = vunpack.c.h.b16 %v839
    %v1025 = vunpack.c.l.b16 %v840
    %v1026 = vunpack.c.h.b16 %v840
    %v1027 = vunpack.c.l.b16 %v841
    %v1028 = vunpack.c.h.b16 %v841
    %v1029 = vunpack.c.l.b16 %v842
    %v1030 = vunpack.c.h.b16 %v842
    %v1031 = vunpack.c.l.b16 %v843
    %v1032 = vunpack.c.h.b16 %v843
    %v1033 = vunpack.c.l.b16 %v844
    %v1034 = vunpack.c.h.b16 %v844
    %v1035 = vunpack.c.l.b16 %v845
    %v1036 = vunpack.c.h.b16 %v845
    %v1037 = vunpack.c.l.b16 %v846
    %v1038 = vunpack.c.h.b16 %v846
    %v1039 = vunpack.c.l.b16 %v847
    %v1040 = vunpack.c.h.b16 %v847
    %v1041 = vunpack.c.l.b16 %v848
    %v1042 = vunpack.c.h.b16 %v848
    %v1043 = vunpack.c.l.b16 %v849
    %v1044 = vunpack.c.h.b16 %v849
    %v1045 = vunpack.c.l.b16 %v850
    %v1046 = vunpack.c.h.b16 %v850
    %v1047 = vunpack.c.l.b16 %v851
    %v1048 = vunpack.c.h.b16 %v851
    %v1049 = vunpack.c.l.b16 %v852
    %v1050 = vunpack.c.h.b16 %v852
    %v1051 = vunpack.c.l.b16 %v853
    %v1052 = vunpack.c.h.b16 %v853
    %v1053 = vunpack.c.l.b16 %v854
    %v1054 = vunpack.c.h.b16 %v854
    %v1055 = vunpack.c.l.b16 %v855
    %v1056 = vunpack.c.h.b16 %v855
    %v1057 = vunpack.c.l.b16 %v856
    %v1058 = vunpack.c.h.b16 %v856
    %v1059 = vunpack.c.l.b16 %v857
    %v1060 = vunpack.c.h.b16 %v857
    %v1061 = vunpack.c.l.b16 %v858
    %v1062 = vunpack.c.h.b16 %v858
    %v1063 = vunpack.c.l.b16 %v859
    %v1064 = vunpack.c.h.b16 %v859
    %v1065 = vunpack.c.l.b16 %v860
    %v1066 = vunpack.c.h.b16 %v860
    %v1067 = vunpack.c.l.b16 %v861
    %v1068 = vunpack.c.h.b16 %v861
    %v1069 = vunpack.c.l.b16 %v862
    %v1070 = vunpack.c.h.b16 %v862
    %v1071 = vunpack.c.l.b16 %v863
    %v1072 = vunpack.c.h.b16 %v863
    %v1073 = vunpack.c.l.b16 %v864
    %v1074 = vunpack.c.h.b16 %v864
    %v1075 = vunpack.c.l.b16 %v865
    %v1076 = vunpack.c.h.b16 %v865
    %v1077 = vunpack.c.l.b16 %v866
    %v1078 = vunpack.c.h.b16 %v866
    %v1079 = vunpack.c.l.b16 %v867
    %v1080 = vunpack.c.h.b16 %v867
    %v1081 = vunpack.c.l.b16 %v868
    %v1082 = vunpack.c.h.b16 %v868
    %v1083 = vunpack.c.l.b16 %v869
    %v1084 = vunpack.c.h.b16 %v869
    %v1085 = vunpack.c.l.b16 %v870
    %v1086 = vunpack.c.h.b16 %v870
    %v1087 = vunpack.c.l.b16 %v871
    %v1088 = vunpack.c.h.b16 %v871
    %v1089 = vunpack.c.l.b16 %v872
    %v1090 = vunpack.c.h.b16 %v872
    %v1091 = vunpack.c.l.b16 %v873
    %v1092 = vunpack.c.h.b16 %v873
    %v1093 = vunpack.c.l.b16 %v874
    %v1094 = vunpack.c.h.b16 %v874
    %v1095 = vunpack.c.l.b16 %v875
    %v1096 = vunpack.c.h.b16 %v875
    %v1097 = vunpack.c.l.b16 %v876
    %v1098 = vunpack.c.h.b16 %v876
    %v1099 = vunpack.c.l.b16 %v877
    %v1100 = vunpack.c.h.b16 %v877
    %v1101 = vunpack.c.l.b16 %v878
    %v1102 = vunpack.c.h.b16 %v878
    %v1103 = vunpack.c.l.b16 %v879
    %v1104 = vunpack.c.h.b16 %v879
    %v1105 = vunpack.c.l.b16 %v880
    %v1106 = vunpack.c.h.b16 %v880
    %v1107 = vunpack.c.l.b16 %v881
    %v1108 = vunpack.c.h.b16 %v881
    %v1109 = vunpack.c.l.b16 %v882
    %v1110 = vunpack.c.h.b16 %v882
    %v1111 = vunpack.c.l.b16 %v883
    %v1112 = vunpack.c.h.b16 %v883
    %v1113 = vunpack.c.l.b16 %v884
    %v1114 = vunpack.c.h.b16 %v884
    %v1115 = vunpack.c.l.b16 %v885
    %v1116 = vunpack.c.h.b16 %v885
    %v1117 = vunpack.c.l.b16 %v886
    %v1118 = vunpack.c.h.b16 %v886
    %v1119 = vunpack.c.l.b16 %v887
    %v1120 = vunpack.c.h.b16 %v887
    %v1121 = vunpack.c.l.b16 %v888
    %v1122 = vunpack.c.h.b16 %v888
    %v1123 = vunpack.c.l.b16 %v889
    %v1124 = vunpack.c.h.b16 %v889
    %v1125 = vunpack.c.l.b16 %v890
    %v1126 = vunpack.c.h.b16 %v890
    %v1127 = vunpack.c.l.b16 %v891
    %v1128 = vunpack.c.h.b16 %v891
    %v1129 = vunpack.c.l.b16 %v892
    %v1130 = vunpack.c.h.b16 %v892
    %v1131 = vunpack.c.l.b16 %v893
    %v1132 = vunpack.c.h.b16 %v893
    %v1133 = vunpack.c.l.b16 %v894
    %v1134 = vunpack.c.h.b16 %v894
    %v1135 = vunpack.c.l.b16 %v895
    %v1136 = vunpack.c.h.b16 %v895
    %v1137 = vunpack.c.l.b16 %v896
    %v1138 = vunpack.c.h.b16 %v896
    %v1139 = vunpack.c.l.b16 %v897
    %v1140 = vunpack.c.h.b16 %v897
    %v1141 = vunpack.c.l.b16 %v898
    %v1142 = vunpack.c.h.b16 %v898
    %v1143 = vunpack.c.l.b16 %v899
    %v1144 = vunpack.c.h.b16 %v899
    %v1145 = vunpack.c.l.b16 %v900
    %v1146 = vunpack.c.h.b16 %v900
    %v1147 = vunpack.c.l.b16 %v901
    %v1148 = vunpack.c.h.b16 %v901
    %v1149 = vunpack.c.l.b16 %v902
    %v1150 = vunpack.c.h.b16 %v902
    %v1151 = vunpack.c.l.b16 %v903
    %v1152 = vunpack.c.h.b16 %v903
    %v1153 = vunpack.c.l.b16 %v904
    %v1154 = vunpack.c.h.b16 %v904
    %v1155 = vunpack.c.l.b16 %v905
    %v1156 = vunpack.c.h.b16 %v905
    %v1157 = vunpack.c.l.b16 %v906
    %v1158 = vunpack.c.h.b16 %v906
    %v1159 = vunpack.c.l.b16 %v907
    %v1160 = vunpack.c.h.b16 %v907
    %v1161 = vunpack.c.l.b16 %v908
    %v1162 = vunpack.c.h.b16 %v908
    %v1163 = vunpack.c.l.b16 %v909
    %v1164 = vunpack.c.h.b16 %v909
    %v1165 = vunpack.c.l.b16 %v910
    %v1166 = vunpack.c.h.b16 %v910
    %v1167 = vunpack.c.l.b16 %v911
    %v1168 = vunpack.c.h.b16 %v911
    %v1169 = vunpack.c.l.b16 %v912
    %v1170 = vunpack.c.h.b16 %v912
    %v1171 = vunpack.c.l.b16 %v913
    %v1172 = vunpack.c.h.b16 %v913
    %v1173 = vunpack.c.l.b16 %v914
    %v1174 = vunpack.c.h.b16 %v914
    %v1175 = vunpack.c.l.b16 %v915
    %v1176 = vunpack.c.h.b16 %v915
    %v1177 = vunpack.c.l.b16 %v916
    %v1178 = vunpack.c.h.b16 %v916
    %v1179 = vpack.c.b16 %v1023, %v1019
    %v1180 = vpack.c.b16 %v1024, %v1020
    %v1181 = vpack.c.b16 %v1025, %v1021
    %v1182 = vpack.c.b16 %v1026, %v1022
    %v1183 = vpack.c.b16 %v1031, %v1027
    %v1184 = vpack.c.b16 %v1032, %v1028
    %v1185 = vpack.c.b16 %v1033, %v1029
    %v1186 = vpack.c.b16 %v1034, %v1030
    %v1187 = vpack.c.b16 %v1039, %v1035
    %v1188 = vpack.c.b16 %v1040, %v1036
    %v1189 = vpack.c.b16 %v1041, %v1037
    %v1190 = vpack.c.b16 %v1042, %v1038
    %v1191 = vpack.c.b16 %v1047, %v1043
    %v1192 = vpack.c.b16 %v1048, %v1044
    %v1193 = vpack.c.b16 %v1049, %v1045
    %v1194 = vpack.c.b16 %v1050, %v1046
    %v1195 = vpack.c.b16 %v1055, %v1051
    %v1196 = vpack.c.b16 %v1056, %v1052
    %v1197 = vpack.c.b16 %v1057, %v1053
    %v1198 = vpack.c.b16 %v1058, %v1054
    %v1199 = vpack.c.b16 %v1063, %v1059
    %v1200 = vpack.c.b16 %v1064, %v1060
    %v1201 = vpack.c.b16 %v1065, %v1061
    %v1202 = vpack.c.b16 %v1066, %v1062
    %v1203 = vpack.c.b16 %v1071, %v1067
    %v1204 = vpack.c.b16 %v1072, %v1068
    %v1205 = vpack.c.b16 %v1073, %v1069
    %v1206 = vpack.c.b16 %v1074, %v1070
    %v1207 = vpack.c.b16 %v1079, %v1075
    %v1208 = vpack.c.b16 %v1080, %v1076
    %v1209 = vpack.c.b16 %v1081, %v1077
    %v1210 = vpack.c.b16 %v1082, %v1078
    %v1211 = vpack.c.b16 %v1087, %v1083
    %v1212 = vpack.c.b16 %v1088, %v1084
    %v1213 = vpack.c.b16 %v1089, %v1085
    %v1214 = vpack.c.b16 %v1090, %v1086
    %v1215 = vpack.c.b16 %v1095, %v1091
    %v1216 = vpack.c.b16 %v1096, %v1092
    %v1217 = vpack.c.b16 %v1097, %v1093
    %v1218 = vpack.c.b16 %v1098, %v1094
    %v1219 = vpack.c.b16 %v1103, %v1099
    %v1220 = vpack.c.b16 %v1104, %v1100
    %v1221 = vpack.c.b16 %v1105, %v1101
    %v1222 = vpack.c.b16 %v1106, %v1102
    %v1223 = vpack.c.b16 %v1111, %v1107
    %v1224 = vpack.c.b16 %v1112, %v1108
    %v1225 = vpack.c.b16 %v1113, %v1109
    %v1226 = vpack.c.b16 %v1114, %v1110
    %v1227 = vpack.c.b16 %v1119, %v1115
    %v1228 = vpack.c.b16 %v1120, %v1116
    %v1229 = vpack.c.b16 %v1121, %v1117
    %v1230 = vpack.c.b16 %v1122, %v1118
    %v1231 = vpack.c.b16 %v1127, %v1123
    %v1232 = vpack.c.b16 %v1128, %v1124
    %v1233 = vpack.c.b16 %v1129, %v1125
    %v1234 = vpack.c.b16 %v1130, %v1126
    %v1235 = vpack.c.b16 %v1135, %v1131
    %v1236 = vpack.c.b16 %v1136, %v1132
    %v1237 = vpack.c.b16 %v1137, %v1133
    %v1238 = vpack.c.b16 %v1138, %v1134
    %v1239 = vpack.c.b16 %v1143, %v1139
    %v1240 = vpack.c.b16 %v1144, %v1140
    %v1241 = vpack.c.b16 %v1145, %v1141
    %v1242 = vpack.c.b16 %v1146, %v1142
    %v1243 = vpack.c.b16 %v1151, %v1147
    %v1244 = vpack.c.b16 %v1152, %v1148
    %v1245 = vpack.c.b16 %v1153, %v1149
    %v1246 = vpack.c.b16 %v1154, %v1150
    %v1247 = vpack.c.b16 %v1159, %v1155
    %v1248 = vpack.c.b16 %v1160, %v1156
    %v1249 = vpack.c.b16 %v1161, %v1157
    %v1250 = vpack.c.b16 %v1162, %v1158
    %v1251 = vpack.c.b16 %v1167, %v1163
    %v1252 = vpack.c.b16 %v1168, %v1164
    %v1253 = vpack.c.b16 %v1169, %v1165
    %v1254 = vpack.c.b16 %v1170, %v1166
    %v1255 = vpack.c.b16 %v1175, %v1171
    %v1256 = vpack.c.b16 %v1176, %v1172
    %v1257 = vpack.c.b16 %v1177, %v1173
    %v1258 = vpack.c.b16 %v1178, %v1174
    %vm1339 = vcmask 523264
    %v1341 = vsel %vm1339, %v836, 0
    %1343 = vmatprep.subr.bf16.mxu0 %v1208
    %1344 = vmatpush1.bf16.msra.mxu0 %v1207
    %1345 = vmatprep.subr.bf16.mxu0 %v1204
    %1346 = vmatpush1.bf16.msra.mxu0 %v1203
    %1347 = vmatprep.subr.bf16.mxu0 %v1200
    %1348 = vmatpush1.bf16.msra.mxu0 %v1199
    %1349 = vmatprep.subr.bf16.mxu0 %v1196
    %1350 = vmatpush1.bf16.msra.mxu0 %v1195
    %1351 = vmatprep.subr.bf16.mxu0 %v1192
    %1352 = vmatpush1.bf16.msra.mxu0 %v1191
    %1353 = vmatprep.subr.bf16.mxu0 %v1188
    %1354 = vmatpush1.bf16.msra.mxu0 %v1187
    %1355 = vmatprep.subr.bf16.mxu0 %v1184
    %1356 = vmatpush1.bf16.msra.mxu0 %v1183
    %1357 = vmatprep.subr.bf16.mxu0 %v1180
    %1358 = vmatpush1.bf16.msra.mxu0 %v1179
    %1359 = vmatprep.subr.bf16.mxu0 %v1240
    %1360 = vmatpush2.bf16.msra.mxu0 %v1239
    %1361 = vmatprep.subr.bf16.mxu0 %v1236
    %1362 = vmatpush2.bf16.msra.mxu0 %v1235
    %1363 = vmatprep.subr.bf16.mxu0 %v1232
    %1364 = vmatpush2.bf16.msra.mxu0 %v1231
    %1365 = vmatprep.subr.bf16.mxu0 %v1228
    %1366 = vmatpush2.bf16.msra.mxu0 %v1227
    %1367 = vmatprep.subr.bf16.mxu0 %v1224
    %1368 = vmatpush2.bf16.msra.mxu0 %v1223
    %1369 = vmatprep.subr.bf16.mxu0 %v1220
    %1370 = vmatpush2.bf16.msra.mxu0 %v1219
    %1371 = vmatprep.subr.bf16.mxu0 %v1216
    %1372 = vmatpush2.bf16.msra.mxu0 %v1215
    %1373 = vmatprep.subr.bf16.mxu0 %v1212
    %1374 = vmatpush2.bf16.msra.mxu0 %v1211
    %1375 = vmatprep.mubr.bf16.mxu0 %v174
    %1376 = vmatmul.mubr.bf16.gmra.mxu0 %v835
    %v1377 = vpop.f32.mrf.mxu0
    %v1378 = vadd.f32 %v922, %v1377
    %v1379 = vpop.f32.mrf.mxu0
    %v1380 = vadd.f32 %v926, %v1379
    %v1381 = vpop.f32.mrf.mxu0
    %v1382 = vpop.f32.mrf.mxu0
    %1383 = vdwg.mxu0
    %1384 = vmatprep.subr.bf16.mxu0 0
    %1385 = vmatpush1.bf16.msra.mxu0 0
    %1386 = vmatprep.subr.bf16.mxu0 0
    %1387 = vmatpush1.bf16.msra.mxu0 0
    %1388 = vmatprep.subr.bf16.mxu0 0
    %1389 = vmatpush1.bf16.msra.mxu0 0
    %1390 = vmatprep.subr.bf16.mxu0 0
    %1391 = vmatpush1.bf16.msra.mxu0 0
    %1392 = vmatprep.subr.bf16.mxu0 %v1256
    %1393 = vmatpush1.bf16.msra.mxu0 %v1255
    %1394 = vmatprep.subr.bf16.mxu0 %v1252
    %1395 = vmatpush1.bf16.msra.mxu0 %v1251
    %1396 = vmatprep.subr.bf16.mxu0 %v1248
    %1397 = vmatpush1.bf16.msra.mxu0 %v1247
    %1398 = vmatprep.subr.bf16.mxu0 %v1244
    %1399 = vmatpush1.bf16.msra.mxu0 %v1243
    %1400 = vmatprep.subr.bf16.mxu0 0
    %1401 = vmatpush2.bf16.msra.mxu0 0
    %1402 = vmatprep.subr.bf16.mxu0 0
    %1403 = vmatpush2.bf16.msra.mxu0 0
    %1404 = vmatprep.subr.bf16.mxu0 0
    %1405 = vmatpush2.bf16.msra.mxu0 0
    %1406 = vmatprep.subr.bf16.mxu0 0
    %1407 = vmatpush2.bf16.msra.mxu0 0
    %1408 = vmatprep.subr.bf16.mxu0 0
    %1409 = vmatpush2.bf16.msra.mxu0 0
    %1410 = vmatprep.subr.bf16.mxu0 0
    %1411 = vmatpush2.bf16.msra.mxu0 0
    %1412 = vmatprep.subr.bf16.mxu0 0
    %1413 = vmatpush2.bf16.msra.mxu0 0
    %1414 = vmatprep.subr.bf16.mxu0 0
    %1415 = vmatpush2.bf16.msra.mxu0 0
    %1416 = vmatprep.mubr.bf16.mxu0 0
    %1417 = vmatmul.mubr.bf16.gmra.mxu0 %v1341
    %v1418 = vpop.f32.mrf.mxu0
    %v1419 = vadd.f32 %v1378, %v1418
    %v1420 = vpop.f32.mrf.mxu0
    %v1421 = vadd.f32 %v1380, %v1420
    %v1422 = vpop.f32.mrf.mxu0
    %v1423 = vpop.f32.mrf.mxu0
    %1424 = vdwg.mxu0
    %1425 = vmatprep.subr.bf16.mxu0 %v1210
    %1426 = vmatpush1.bf16.msra.mxu0 %v1209
    %1427 = vmatprep.subr.bf16.mxu0 %v1206
    %1428 = vmatpush1.bf16.msra.mxu0 %v1205
    %1429 = vmatprep.subr.bf16.mxu0 %v1202
    %1430 = vmatpush1.bf16.msra.mxu0 %v1201
    %1431 = vmatprep.subr.bf16.mxu0 %v1198
    %1432 = vmatpush1.bf16.msra.mxu0 %v1197
    %1433 = vmatprep.subr.bf16.mxu0 %v1194
    %1434 = vmatpush1.bf16.msra.mxu0 %v1193
    %1435 = vmatprep.subr.bf16.mxu0 %v1190
    %1436 = vmatpush1.bf16.msra.mxu0 %v1189
    %1437 = vmatprep.subr.bf16.mxu0 %v1186
    %1438 = vmatpush1.bf16.msra.mxu0 %v1185
    %1439 = vmatprep.subr.bf16.mxu0 %v1182
    %1440 = vmatpush1.bf16.msra.mxu0 %v1181
    %1441 = vmatprep.subr.bf16.mxu0 %v1242
    %1442 = vmatpush2.bf16.msra.mxu0 %v1241
    %1443 = vmatprep.subr.bf16.mxu0 %v1238
    %1444 = vmatpush2.bf16.msra.mxu0 %v1237
    %1445 = vmatprep.subr.bf16.mxu0 %v1234
    %1446 = vmatpush2.bf16.msra.mxu0 %v1233
    %1447 = vmatprep.subr.bf16.mxu0 %v1230
    %1448 = vmatpush2.bf16.msra.mxu0 %v1229
    %1449 = vmatprep.subr.bf16.mxu0 %v1226
    %1450 = vmatpush2.bf16.msra.mxu0 %v1225
    %1451 = vmatprep.subr.bf16.mxu0 %v1222
    %1452 = vmatpush2.bf16.msra.mxu0 %v1221
    %1453 = vmatprep.subr.bf16.mxu0 %v1218
    %1454 = vmatpush2.bf16.msra.mxu0 %v1217
    %1455 = vmatprep.subr.bf16.mxu0 %v1214
    %1456 = vmatpush2.bf16.msra.mxu0 %v1213
    %1457 = vmatprep.mubr.bf16.mxu0 %v174
    %1458 = vmatmul.mubr.bf16.gmra.mxu0 %v835
    %v1459 = vpop.f32.mrf.mxu0
    %v1460 = vadd.f32 %v930, %v1459
    %v1461 = vpop.f32.mrf.mxu0
    %v1462 = vadd.f32 %v934, %v1461
    %v1463 = vpop.f32.mrf.mxu0
    %v1464 = vpop.f32.mrf.mxu0
    %1465 = vdwg.mxu0
    %1466 = vmatprep.subr.bf16.mxu0 0
    %1467 = vmatpush1.bf16.msra.mxu0 0
    %1468 = vmatprep.subr.bf16.mxu0 0
    %1469 = vmatpush1.bf16.msra.mxu0 0
    %1470 = vmatprep.subr.bf16.mxu0 0
    %1471 = vmatpush1.bf16.msra.mxu0 0
    %1472 = vmatprep.subr.bf16.mxu0 0
    %1473 = vmatpush1.bf16.msra.mxu0 0
    %1474 = vmatprep.subr.bf16.mxu0 %v1258
    %1475 = vmatpush1.bf16.msra.mxu0 %v1257
    %1476 = vmatprep.subr.bf16.mxu0 %v1254
    %1477 = vmatpush1.bf16.msra.mxu0 %v1253
    %1478 = vmatprep.subr.bf16.mxu0 %v1250
    %1479 = vmatpush1.bf16.msra.mxu0 %v1249
    %1480 = vmatprep.subr.bf16.mxu0 %v1246
    %1481 = vmatpush1.bf16.msra.mxu0 %v1245
    %1482 = vmatprep.subr.bf16.mxu0 0
    %1483 = vmatpush2.bf16.msra.mxu0 0
    %1484 = vmatprep.subr.bf16.mxu0 0
    %1485 = vmatpush2.bf16.msra.mxu0 0
    %1486 = vmatprep.subr.bf16.mxu0 0
    %1487 = vmatpush2.bf16.msra.mxu0 0
    %1488 = vmatprep.subr.bf16.mxu0 0
    %1489 = vmatpush2.bf16.msra.mxu0 0
    %1490 = vmatprep.subr.bf16.mxu0 0
    %1491 = vmatpush2.bf16.msra.mxu0 0
    %1492 = vmatprep.subr.bf16.mxu0 0
    %1493 = vmatpush2.bf16.msra.mxu0 0
    %1494 = vmatprep.subr.bf16.mxu0 0
    %1495 = vmatpush2.bf16.msra.mxu0 0
    %1496 = vmatprep.subr.bf16.mxu0 0
    %1497 = vmatpush2.bf16.msra.mxu0 0
    %1498 = vmatprep.mubr.bf16.mxu0 0
    %1499 = vmatmul.mubr.bf16.gmra.mxu0 %v1341
    %v1500 = vpop.f32.mrf.mxu0
    %v1501 = vadd.f32 %v1460, %v1500
    %v1502 = vpop.f32.mrf.mxu0
    %v1503 = vadd.f32 %v1462, %v1502
    %v1504 = vpop.f32.mrf.mxu0
    %v1505 = vpop.f32.mrf.mxu0
    %1506 = vdwg.mxu0
    %v1507 = vxor.u32 %v1419, 2147483648
    %v1508 = vmul.f32 %v1507, 1.442695
    %v1509 = vpow.pop %v1508
    %v1510 = vadd.f32 %v1509, 1.0
    %v1511 = vrcp.pop %v1510
    %v1512 = vmul.f32 1.0, %v1511
    %v1513 = vxor.u32 %v1421, 2147483648
    %v1514 = vmul.f32 %v1513, 1.442695
    %v1515 = vpow.pop %v1514
    %v1516 = vadd.f32 %v1515, 1.0
    %v1517 = vrcp.pop %v1516
    %v1518 = vmul.f32 1.0, %v1517
    %v1519 = vtanh.pop %v1501
    %v1520 = vxor.u32 %v1503, 2147483648
    %v1521 = vmul.f32 %v1520, 1.442695
    %v1522 = vpow.pop %v1521
    %v1523 = vadd.f32 %v1522, 1.0
    %v1524 = vrcp.pop %v1523
    %v1525 = vmul.f32 1.0, %v1524
    %v1526 = vmul.f32 %v1518, %v157
    %v1527 = vmul.f32 %v1512, %v1519
    %v1528 = vadd.f32 %v1526, %v1527
    %v1529 = vtanh.pop %v1528
    %v1530 = vmul.f32 %v1525, %v1529
    %1531 = vst [vmem:[#allocation18] sm:$0xff] %v1530
    %1532 = vst [vmem:[#allocation19] sm:$0xff] %v1528
    // Predicated region
    $region82: #{tpu_custom_call.1} parent=1 // pred_check
      _
    $region83: #{tpu_custom_call.1} parent=1 // pred_check_branch
      %1534 = sbr.rel (0) target = $region85
    $region84: #{tpu_custom_call.1} parent=1 // pred_region
      %s1536 = ssub.s32 128, 128
      %1537 = vsyncadd [#allocation5], %s1536
      %s1539 = sshll.u32 [#allocation18], 4
      %s1540 = int_to_ptr.vmem [resolvable:$true] %s1539
      %1542 = dma.vmem_to_hbm [thread:$0]  %s1540, 128, %s11, [#allocation5]
    $region85: #{tpu_custom_call.1} parent=1 // pred_fallthru
      _
    // Predicated region
    $region86: #{tpu_custom_call.1} parent=1 // pred_check
      _
    $region87: #{tpu_custom_call.1} parent=1 // pred_check_branch
      %1544 = sbr.rel (0) target = $region89
    $region88: #{tpu_custom_call.1} parent=1 // pred_region
      %s1546 = ssub.s32 128, 128
      %1547 = vsyncadd [#allocation20], %s1546
      %s1549 = sshll.u32 [#allocation19], 4
      %s1550 = int_to_ptr.vmem [resolvable:$true] %s1549
      %1552 = dma.vmem_to_hbm [thread:$0]  %s1550, 128, %s12, [#allocation20]
    $region89: #{tpu_custom_call.1} parent=1 // pred_fallthru
      _
    // Predicated region
    $region90: #{tpu_custom_call.1} parent=1 // pred_check
      _
    $region91: #{tpu_custom_call.1} parent=1 // pred_check_branch
      %1554 = sbr.rel (0) target = $region93
    $region92: #{tpu_custom_call.1} parent=1 // pred_region
      %1555 = dma.done [#allocation5], 128
    $region93: #{tpu_custom_call.1} parent=1 // pred_fallthru
      _
    // Predicated region
    $region94: #{tpu_custom_call.1} parent=1 // pred_check
      _
    $region95: #{tpu_custom_call.1} parent=1 // pred_check_branch
      %1557 = sbr.rel (0) target = $region97
    $region96: #{tpu_custom_call.1} parent=1 // pred_region
      %1558 = dma.done [#allocation20], 128
    $region97: #{tpu_custom_call.1} parent=1 // pred_fallthru
      _
    %1559 = vsyncpa [#allocation4], 1
    %1560 = vsyncpa [#allocation7], 1
    %1561 = vsyncpa [#allocation10], 1
    %1562 = vsyncpa [#allocation13], 1
    %1563 = vsyncpa [#allocation16], 1
    %1564 = vsyncpa [#allocation5], 1
    %1565 = vsyncpa [#allocation20], 1

</llo_original>
